<compile_context>
chip_gen: v6e
topology: v6e:2x2x1
jax: 0.10.0
libtpu: 0.0.40
codegen_flags: <defaults>
</compile_context>

<pallas_src>
import math

import jax
import jax.numpy as jnp
from jax.experimental import pallas as pl
from jax.experimental.pallas import tpu as pltpu

_HIGH = jax.lax.Precision.HIGHEST


def _ceil_to(x, m):
    return ((x + m - 1) // m) * m


# ---------------------------------------------------------------------------
# Fused per-path kernel: [dim-trans block] + block_num x (H -> H) Atrous blocks + max-pool
# ---------------------------------------------------------------------------
def _make_path_kernel(c_in, c_out, L, dim_trans, layer_num, dilations, P, HR, nb):

    def conv_from(src_ref, stack_ref, c_src, w_ref, b_ref, d):
        # Conv1d(k=3, dilation=d, padding=d) as ONE MXU matmul: stage the 3 dilated taps
        # as sublane blocks of an im2col buffer (src has a zero halo, so out-of-range taps
        # read zeros), then a single (c_out, 3*c_src) x (3*c_src, L) bf16 dot, f32 accum.
        stack_ref[0:c_src, :] = src_ref[:, P - d:P - d + L]
        stack_ref[c_src:2 * c_src, :] = src_ref[:, P:P + L]
        stack_ref[2 * c_src:3 * c_src, :] = src_ref[:, P + d:P + d + L]
        return (jnp.dot(w_ref[...], stack_ref[...],
                        preferred_element_type=jnp.float32) + b_ref[...])

    def kernel(*refs):
        pos = 1
        x_ref = refs[0]
        if dim_trans:
            win_ref, bin_ref = refs[1], refs[2]
            pos = 3
        w_refs = refs[pos:pos + 2 * layer_num]
        pos += 2 * layer_num
        pool_ref = refs[pos]
        act_ref = refs[pos + 1]          # (c_out, L) f32, resident across the block chain
        ybuf = refs[pos + 2]             # (c_out, P+L+HR) bf16, zero-halo ReLU buffer
        stk = refs[pos + 3]              # (3*c_out, L) bf16, tap-stacked im2col buffer
        if dim_trans:
            xbuf = refs[pos + 4]         # (c_in, P+L+HR) bf16
            stk_in = refs[pos + 5]       # (3*c_in, L) bf16

        k = pl.program_id(1)

        @pl.when(k == 0)
        def _start_path():
            # Zero ONLY the halo columns once per batch element; the interior is fully
            # overwritten by every conv layer.
            zo = jnp.zeros((c_out, HR), jnp.bfloat16)
            ybuf[:, P - HR:P] = zo
            ybuf[:, P + L:P + L + HR] = zo
            if dim_trans:
                zi = jnp.zeros((c_in, HR), jnp.bfloat16)
                xbuf[:, P - HR:P] = zi
                xbuf[:, P + L:P + L + HR] = zi
                xbuf[:, P:P + L] = x_ref[...]
                # input_layer: Conv1d(c_in -> c_out, k=3, pad=1) + InstanceNorm1d(affine=False)
                h = conv_from(xbuf, stk_in, c_in, win_ref, bin_ref, 1)
                mean = jnp.mean(h, axis=-1, keepdims=True)
                diff = h - mean
                var = jnp.mean(diff * diff, axis=-1, keepdims=True)  # biased, like PyTorch
                act_ref[...] = diff * jax.lax.rsqrt(var + 1e-5)      # EUP rsqrt, no divide
            else:
                act_ref[...] = x_ref[...].astype(jnp.float32)

        # One Atrous_block body on the resident activation, using block k's weights.
        h0 = act_ref[...]                                            # residual base, f32
        y = h0
        for i in range(layer_num):
            ybuf[:, P:P + L] = jnp.maximum(y, 0.0).astype(jnp.bfloat16)  # ReLU -> bf16
            y = conv_from(ybuf, stk, c_out,
                          w_refs[2 * i], w_refs[2 * i + 1], dilations[i])
        act_ref[...] = jnp.maximum(y + h0, 0.0)                      # ReLU(y + x)

        @pl.when(k == nb - 1)
        def _end_path():
            # global max-pool over the length axis, fused into the last block
            pool_ref[...] = jnp.max(act_ref[...], axis=-1,
                                    keepdims=True).astype(pool_ref.dtype)

    return kernel


def atrous_path(x, prep, layer_num=3):
    """x: (B, c_in_padded, L) bf16. Returns pooled features (B, H, 1) f32."""
    B, c_in, L = x.shape
    H = prep['c_out']
    nb = prep['nb']
    dim_trans = prep['dim_trans']
    assert c_in == prep['c_in']
    dilations = [3 ** i for i in range(layer_num)]
    maxd = max(dilations)
    P = max(128, _ceil_to(maxd, 128))    # lane-aligned data offset inside halo buffers
    HR = _ceil_to(maxd, 16)              # halo columns that must hold zeros
    WBUF = P + L + HR

    inputs = [x]
    in_specs = [pl.BlockSpec((None, c_in, L), lambda b, k: (b, 0, 0))]
    if dim_trans:
        inputs += [prep['w_in'], prep['b_in']]
        in_specs += [pl.BlockSpec(prep['w_in'].shape, lambda b, k: (0, 0)),
                     pl.BlockSpec(prep['b_in'].shape, lambda b, k: (0, 0))]
    for j in range(layer_num):
        inputs += [prep['ws'][j], prep['bs'][j]]
        in_specs += [pl.BlockSpec((None, H, 3 * H), lambda b, k: (k, 0, 0)),
                     pl.BlockSpec((None, H, 1), lambda b, k: (k, 0, 0))]

    scratch = [pltpu.VMEM((H, L), jnp.float32),        # resident activation
               pltpu.VMEM((H, WBUF), jnp.bfloat16),    # zero-halo ReLU buffer
               pltpu.VMEM((3 * H, L), jnp.bfloat16)]   # tap-stacked im2col buffer
    if dim_trans:
        scratch += [pltpu.VMEM((c_in, WBUF), jnp.bfloat16),
                    pltpu.VMEM((3 * c_in, L), jnp.bfloat16)]

    return pl.pallas_call(
        _make_path_kernel(c_in, H, L, dim_trans, layer_num, dilations, P, HR, nb),
        out_shape=jax.ShapeDtypeStruct((B, H, 1), jnp.float32),
        grid_spec=pltpu.PrefetchScalarGridSpec(
            num_scalar_prefetch=0,
            grid=(B, nb),
            in_specs=in_specs,
            out_specs=pl.BlockSpec((None, H, 1), lambda b, k: (b, 0, 0)),
            scratch_shapes=scratch,
        ),
        compiler_params=pltpu.CompilerParams(
            dimension_semantics=("parallel", "arbitrary"),
            vmem_limit_bytes=48 * 1024 * 1024),
    )(*inputs)


# ---------------------------------------------------------------------------
# Fused head kernel on pooled (B, H) features: concat-dense + residual MLP + classifier
# ---------------------------------------------------------------------------
def _head_kernel(x1_ref, x2_ref, x3_ref,
                 wca_ref, wcb_ref, wcc_ref, bc_ref,
                 w1_ref, b1_ref, w2_ref, b2_ref, w3_ref, b3_ref,
                 wcls_ref, bcls_ref, o_ref):
    def leaky(v):
        return jnp.where(v > 0, v, 0.01 * v)          # LeakyReLU(0.01)

    x1 = x1_ref[...]
    x2 = x2_ref[...]
    x3 = x3_ref[...]

    # dense_concat(cat([x1, x2, x3])) with the weight pre-split into three chunks:
    # no lane-axis concatenate inside the kernel.
    h = (jnp.dot(x1, wca_ref[...], preferred_element_type=jnp.float32)
         + jnp.dot(x2, wcb_ref[...], preferred_element_type=jnp.float32)
         + jnp.dot(x3, wcc_ref[...], preferred_element_type=jnp.float32)
         + bc_ref[...])

    r = leaky(h)
    r = jnp.dot(r, w1_ref[...], preferred_element_type=jnp.float32) + b1_ref[...]
    r = leaky(r)
    r = jnp.dot(r, w2_ref[...], preferred_element_type=jnp.float32) + b2_ref[...]
    r = leaky(r)
    # Dropout(p=0.0) == identity at inference
    r = jnp.dot(r, w3_ref[...], preferred_element_type=jnp.float32) + b3_ref[...]

    z = leaky(h + r)
    logit = jnp.dot(z, wcls_ref[...], preferred_element_type=jnp.float32) + bcls_ref[...]
    p = 1.0 / (1.0 + jnp.exp(-logit))
    o_ref[...] = jnp.clip(p, 0.001, 0.999).astype(o_ref.dtype)


# ---------------------------------------------------------------------------
# Parameter preparation (all transposes / tap-stacking / padding / bf16 casts done once)
# ---------------------------------------------------------------------------
def prepare_params(params, layer_num=3):
    def prep_conv_w(w):
        # (c_out, c_src, 3) -> (c_out, 3*c_src) with layout [tap, channel]
        c_out, c_src, _ = w.shape
        return jnp.transpose(w, (0, 2, 1)).reshape(c_out, 3 * c_src)

    def prep_path(first, blocks):
        H = first['ws'][0].shape[0]
        assert H % 8 == 0, "hidden_dim must be a multiple of 8"
        dim_trans = 'in_w' in first
        d = {'dim_trans': dim_trans, 'c_out': H, 'nb': 1 + len(blocks)}
        if dim_trans:
            c_raw = first['in_w'].shape[1]
            c_pad = _ceil_to(c_raw, 16)
            w_in = jnp.pad(first['in_w'], ((0, 0), (0, c_pad - c_raw), (0, 0)))
            d['w_in'] = prep_conv_w(w_in).astype(jnp.bfloat16)           # (H, 3*c_pad)
            d['b_in'] = first['in_b'].reshape(-1, 1).astype(jnp.float32)  # (H, 1)
            d['c_in'] = c_pad
        else:
            d['c_in'] = H
        allb = [first] + list(blocks)
        d['ws'], d['bs'] = [], []
        for j in range(layer_num):
            wj = jnp.stack([prep_conv_w(p['ws'][j]) for p in allb]).astype(jnp.bfloat16)
            bj = jnp.stack([p['bs'][j].reshape(-1, 1) for p in allb]).astype(jnp.float32)
            d['ws'].append(wj)           # (nb, H, 3H)
            d['bs'].append(bj)           # (nb, H, 1)
        return d

    prep = {'ag': prep_path(params['ag_gnn1'], params['ag_gnn2']),
            'ab': prep_path(params['ab_gnn1'], params['ab_gnn2']),
            'layer_num': layer_num}
    H = prep['ag']['c_out']
    wct = params['dense_concat']['w'].T.astype(jnp.float32)              # (3H, h1)
    head = {'wca': wct[:H], 'wcb': wct[H:2 * H], 'wcc': wct[2 * H:],
            'bc': params['dense_concat']['b'].reshape(1, -1).astype(jnp.float32)}
    for name in ('res_fc1', 'res_fc2', 'res_fc3', 'classifier'):
        head['w_' + name] = params[name]['w'].T.astype(jnp.float32)
        head['b_' + name] = params[name]['b'].reshape(1, -1).astype(jnp.float32)
    prep['head'] = head
    return prep


def _prep_path_input(x, c_in_target):
    """(B, L, C) f32 -> (B, C_padded, L) bf16 (zero channel padding is an exact no-op)."""
    xt = jnp.transpose(x, (0, 2, 1))
    c = xt.shape[1]
    if c < c_in_target:
        xt = jnp.pad(xt, ((0, 0), (0, c_in_target - c), (0, 0)))
    return xt.astype(jnp.bfloat16)


# ---------------------------------------------------------------------------
# Full forward
# ---------------------------------------------------------------------------
def xbcr_forward(prep, ag_x, ab_x, ab_l):
    """ag_x: (B, L_ag, 20); ab_x: (B, L_ab, D); ab_l: (B, L_al, D). Returns [(B, 1)]."""
    layer_num = prep['layer_num']
    B = ag_x.shape[0]

    ag = _prep_path_input(ag_x, prep['ag']['c_in'])
    abx = _prep_path_input(ab_x, prep['ab']['c_in'])
    abl = _prep_path_input(ab_l, prep['ab']['c_in'])

    ag_p = atrous_path(ag, prep['ag'], layer_num=layer_num)              # (B, H, 1)
    if abx.shape == abl.shape:
        # ab_x / ab_l share weights: merge into one padded-batch call (weights streamed
        # once, parallel grid axis >= 2 keeps both v7x TensorCores busy).
        both = atrous_path(jnp.concatenate([abx, abl], axis=0), prep['ab'],
                           layer_num=layer_num)
        ab_p, al_p = both[:B], both[B:]
    else:
        ab_p = atrous_path(abx, prep['ab'], layer_num=layer_num)
        al_p = atrous_path(abl, prep['ab'], layer_num=layer_num)

    x1, x2, x3 = ag_p[:, :, 0], ab_p[:, :, 0], al_p[:, :, 0]             # (B, H) f32
    head = prep['head']
    out = pl.pallas_call(
        _head_kernel,
        out_shape=jax.ShapeDtypeStruct((B, 1), jnp.float32),
    )(x1, x2, x3,
      head['wca'], head['wcb'], head['wcc'], head['bc'],
      head['w_res_fc1'], head['b_res_fc1'],
      head['w_res_fc2'], head['b_res_fc2'],
      head['w_res_fc3'], head['b_res_fc3'],
      head['w_classifier'], head['b_classifier'])
    return [out]


# ---------------------------------------------------------------------------
# Deterministic parameter init (PyTorch-default-style uniform bounds)
# ---------------------------------------------------------------------------
def _init_conv(key, c_out, c_in, k=3):
    kw, kb = jax.random.split(key)
    bound = 1.0 / math.sqrt(c_in * k)
    w = jax.random.uniform(kw, (c_out, c_in, k), jnp.float32, -bound, bound)
    b = jax.random.uniform(kb, (c_out,), jnp.float32, -bound, bound)
    return w, b


def _init_linear(key, c_out, c_in):
    kw, kb = jax.random.split(key)
    bound = 1.0 / math.sqrt(c_in)
    w = jax.random.uniform(kw, (c_out, c_in), jnp.float32, -bound, bound)
    b = jax.random.uniform(kb, (c_out,), jnp.float32, -bound, bound)
    return w, b


def _init_atrous(key, c_in, c_out, layer_num=3):
    keys = jax.random.split(key, layer_num + 1)
    p = {'ws': [], 'bs': []}
    if c_in != c_out:
        p['in_w'], p['in_b'] = _init_conv(keys[0], c_out, c_in)
    for i in range(layer_num):
        w, b = _init_conv(keys[i + 1], c_out, c_out)
        p['ws'].append(w)
        p['bs'].append(b)
    return p


def init_params(key, node_attr_dim, hidden_dim, h1_dim, block_num):
    ks = jax.random.split(key, 8 + 2 * block_num)
    params = {
        'ag_gnn1': _init_atrous(ks[0], 20, hidden_dim),
        'ag_gnn2': [_init_atrous(ks[1 + i], hidden_dim, hidden_dim)
                    for i in range(block_num)],
        'ab_gnn1': _init_atrous(ks[1 + block_num], node_attr_dim, hidden_dim),
        'ab_gnn2': [_init_atrous(ks[2 + block_num + i], hidden_dim, hidden_dim)
                    for i in range(block_num)],
    }
    o = 2 + 2 * block_num
    wc, bc = _init_linear(ks[o], h1_dim, 3 * hidden_dim)
    params['dense_concat'] = {'w': wc, 'b': bc}
    for idx, name in enumerate(['res_fc1', 'res_fc2', 'res_fc3']):
        w, b = _init_linear(ks[o + 1 + idx], h1_dim, h1_dim)
        params[name] = {'w': w, 'b': b}
    w, b = _init_linear(ks[o + 4], 1, h1_dim)
    params['classifier'] = {'w': w, 'b': b}
    return params


# ---------------------------------------------------------------------------
# Pure-JAX references for verification
# ---------------------------------------------------------------------------
def _head_ref(params, x1, x2, x3):
    def leaky(v):
        return jnp.where(v > 0, v, 0.01 * v)

    def mm(a, name):
        return jnp.dot(a, params[name]['w'].T, precision=_HIGH) + params[name]['b']

    xcat = jnp.concatenate([x1, x2, x3], axis=1)
    h = (jnp.dot(xcat, params['dense_concat']['w'].T, precision=_HIGH)
         + params['dense_concat']['b'])
    r = leaky(h)
    r = mm(r, 'res_fc1')
    r = leaky(r)
    r = mm(r, 'res_fc2')
    r = leaky(r)
    r = mm(r, 'res_fc3')
    z = leaky(h + r)
    logit = mm(z, 'classifier')
    return jnp.clip(1.0 / (1.0 + jnp.exp(-logit)), 0.001, 0.999)


# (a) PyTorch-exact f32 reference
def _conv1d_f32(x, w, b, d):
    y = jax.lax.conv_general_dilated(
        x, w, window_strides=(1,), padding=[(d, d)], rhs_dilation=(d,),
        dimension_numbers=('NCH', 'OIH', 'NCH'), precision=_HIGH)
    return y + b[None, :, None]


def _atrous_ref_f32(x, p, layer_num=3):
    if 'in_w' in p:
        h = _conv1d_f32(x, p['in_w'], p['in_b'], 1)
        m = h.mean(axis=-1, keepdims=True)
        v = ((h - m) ** 2).mean(axis=-1, keepdims=True)
        h = (h - m) / jnp.sqrt(v + 1e-5)
    else:
        h = x
    y = h
    for i in range(layer_num):
        y = _conv1d_f32(jnp.maximum(y, 0.0), p['ws'][i], p['bs'][i], 3 ** i)
    return jnp.maximum(y + h, 0.0)


def _forward_ref_f32(params, ag_x, ab_x, ab_l):
    def path(x, first, blocks):
        h = _atrous_ref_f32(jnp.transpose(x, (0, 2, 1)), first)
        for bp in blocks:
            h = _atrous_ref_f32(h, bp)
        return h.max(axis=-1)

    x1 = path(ag_x, params['ag_gnn1'], params['ag_gnn2'])
    x2 = path(ab_x, params['ab_gnn1'], params['ab_gnn2'])
    x3 = path(ab_l, params['ab_gnn1'], params['ab_gnn2'])
    return _head_ref(params, x1, x2, x3)


# (b) mixed-precision reference mirroring the kernel's bf16-matmul / f32-accumulate math
def _conv1d_mixed(x_bf16, w, b, d):
    y = jax.lax.conv_general_dilated(
        x_bf16, w.astype(jnp.bfloat16), window_strides=(1,), padding=[(d, d)],
        rhs_dilation=(d,), dimension_numbers=('NCH', 'OIH', 'NCH'),
        preferred_element_type=jnp.float32)
    return y + b[None, :, None]


def _atrous_ref_mixed(h_in, p, layer_num=3):
    if 'in_w' in p:
        hh = _conv1d_mixed(h_in.astype(jnp.bfloat16), p['in_w'], p['in_b'], 1)
        m = hh.mean(axis=-1, keepdims=True)
        v = ((hh - m) ** 2).mean(axis=-1, keepdims=True)
        h0 = (hh - m) * jax.lax.rsqrt(v + 1e-5)
    else:
        h0 = h_in
    y = h0
    for i in range(layer_num):
        y = _conv1d_mixed(jnp.maximum(y, 0.0).astype(jnp.bfloat16),
                          p['ws'][i], p['bs'][i], 3 ** i)
    return jnp.maximum(y + h0, 0.0)


def _forward_ref_mixed(params, ag_x, ab_x, ab_l):
    def path(x, first, blocks):
        h = jnp.transpose(x, (0, 2, 1)).astype(jnp.bfloat16).astype(jnp.float32)
        h = _atrous_ref_mixed(h, first)
        for bp in blocks:
            h = _atrous_ref_mixed(h, bp)
        return h.max(axis=-1)

    x1 = path(ag_x, params['ag_gnn1'], params['ag_gnn2'])
    x2 = path(ab_x, params['ab_gnn1'], params['ab_gnn2'])
    x3 = path(ab_l, params['ab_gnn1'], params['ab_gnn2'])
    return _head_ref(params, x1, x2, x3)


if __name__ == "__main__":
    key = jax.random.PRNGKey(0)
    k_param, k_ag, k_ab, k_al = jax.random.split(key, 4)

    # Small test configuration consistent with the module's forward.
    batch = 2
    hidden_dim = 32
    node_attr_dim = 32          # == hidden_dim -> exercises the identity input_layer branch
    h1_dim = 16
    block_num = 2
    len_ag, len_ab, len_al = 24, 16, 16

    params = init_params(k_param, node_attr_dim, hidden_dim, h1_dim, block_num)
    prep = prepare_params(params)

    ag_x = jax.random.normal(k_ag, (batch, len_ag, 20), dtype=jnp.float32)
    ab_x = jax.random.normal(k_ab, (batch, len_ab, node_attr_dim), dtype=jnp.float32)
    ab_l = jax.random.normal(k_al, (batch, len_al, node_attr_dim), dtype=jnp.float32)

    out = xbcr_forward(prep, ag_x, ab_x, ab_l)[0]
    out = jax.block_until_ready(out)

    ref_mixed = _forward_ref_mixed(params, ag_x, ab_x, ab_l)
    ref_f32 = _forward_ref_f32(params, ag_x, ab_x, ab_l)

    assert out.shape == (batch, 1)
    assert bool(jnp.all(jnp.isfinite(out)))
    assert jnp.allclose(out, ref_mixed, atol=2e-3, rtol=2e-3), (
        "mismatch vs mixed-precision reference: max abs diff "
        f"{float(jnp.max(jnp.abs(out - ref_mixed)))}")
    assert jnp.allclose(out, ref_f32, atol=5e-2, rtol=5e-2), (
        "mismatch vs f32 reference: max abs diff "
        f"{float(jnp.max(jnp.abs(out - ref_f32)))}")

    print("KERNEL_OK")
</pallas_src>

<mosaic_0001>
module attributes {stable_mosaic.version = 11 : i64} {
  func.func @kernel(%arg0: i32, %arg1: i32, %arg2: memref<1x32x24xbf16, #tpu.memory_space<vmem>>, %arg3: memref<32x96xbf16, #tpu.memory_space<vmem>>, %arg4: memref<32x1xf32, #tpu.memory_space<vmem>>, %arg5: memref<1x32x96xbf16, #tpu.memory_space<vmem>>, %arg6: memref<1x32x1xf32, #tpu.memory_space<vmem>>, %arg7: memref<1x32x96xbf16, #tpu.memory_space<vmem>>, %arg8: memref<1x32x1xf32, #tpu.memory_space<vmem>>, %arg9: memref<1x32x96xbf16, #tpu.memory_space<vmem>>, %arg10: memref<1x32x1xf32, #tpu.memory_space<vmem>>, %arg11: memref<1x32x1xf32, #tpu.memory_space<vmem>>, %arg12: memref<32x24xf32, #tpu.memory_space<vmem>>, %arg13: memref<32x168xbf16, #tpu.memory_space<vmem>>, %arg14: memref<96x24xbf16, #tpu.memory_space<vmem>>, %arg15: memref<32x168xbf16, #tpu.memory_space<vmem>>, %arg16: memref<96x24xbf16, #tpu.memory_space<vmem>>) attributes {dimension_semantics = [#tpu.dimension_semantics<parallel>, #tpu.dimension_semantics<arbitrary>], iteration_bounds = array<i64: 2, 3>, scalar_prefetch = 0 : i64, scratch_operands = 5 : i64, tpu.core_type = #tpu.core_type<tc>, window_params = [{transform_indices = @transform_0, window_bounds = array<i64: 1, 32, 24>}, {pipeline_mode = #tpu.pipeline_mode<synchronous>, transform_indices = @transform_1, window_bounds = array<i64: 32, 96>}, {pipeline_mode = #tpu.pipeline_mode<synchronous>, transform_indices = @transform_2, window_bounds = array<i64: 32, 1>}, {transform_indices = @transform_3, window_bounds = array<i64: 1, 32, 96>}, {transform_indices = @transform_4, window_bounds = array<i64: 1, 32, 1>}, {transform_indices = @transform_5, window_bounds = array<i64: 1, 32, 96>}, {transform_indices = @transform_6, window_bounds = array<i64: 1, 32, 1>}, {transform_indices = @transform_7, window_bounds = array<i64: 1, 32, 96>}, {transform_indices = @transform_8, window_bounds = array<i64: 1, 32, 1>}, {transform_indices = @transform_9, window_bounds = array<i64: 1, 32, 1>}]} {
    %c0_i32 = arith.constant 0 : i32
    %0 = arith.cmpi eq, %arg1, %c0_i32 : i32
    %1 = arith.extui %0 : i1 to i32
    %c0_i32_0 = arith.constant 0 : i32
    %2 = arith.cmpi ne, %1, %c0_i32_0 : i32
    scf.if %2 {
      %cst_68 = arith.constant 0.000000e+00 : bf16
      %65 = vector.broadcast %cst_68 : bf16 to vector<32x16xbf16>
      %c0_69 = arith.constant 0 : index
      %c112 = arith.constant 112 : index
      %66 = vector.load %arg13[%c0_69, %c112] : memref<32x168xbf16, #tpu.memory_space<vmem>>, vector<32x16xbf16>
      tpu.vector_store %arg13[%c0_69, %c112], %65 {strides = array<i32>} : memref<32x168xbf16, #tpu.memory_space<vmem>>, vector<32x16xbf16>,
      %c0_70 = arith.constant 0 : index
      %c152 = arith.constant 152 : index
      %67 = vector.load %arg13[%c0_70, %c152] : memref<32x168xbf16, #tpu.memory_space<vmem>>, vector<32x16xbf16>
      tpu.vector_store %arg13[%c0_70, %c152], %65 {strides = array<i32>} : memref<32x168xbf16, #tpu.memory_space<vmem>>, vector<32x16xbf16>,
      %cst_71 = arith.constant 0.000000e+00 : bf16
      %68 = vector.broadcast %cst_71 : bf16 to vector<32x16xbf16>
      %c0_72 = arith.constant 0 : index
      %c112_73 = arith.constant 112 : index
      %69 = vector.load %arg15[%c0_72, %c112_73] : memref<32x168xbf16, #tpu.memory_space<vmem>>, vector<32x16xbf16>
      tpu.vector_store %arg15[%c0_72, %c112_73], %68 {strides = array<i32>} : memref<32x168xbf16, #tpu.memory_space<vmem>>, vector<32x16xbf16>,
      %c0_74 = arith.constant 0 : index
      %c152_75 = arith.constant 152 : index
      %70 = vector.load %arg15[%c0_74, %c152_75] : memref<32x168xbf16, #tpu.memory_space<vmem>>, vector<32x16xbf16>
      tpu.vector_store %arg15[%c0_74, %c152_75], %68 {strides = array<i32>} : memref<32x168xbf16, #tpu.memory_space<vmem>>, vector<32x16xbf16>,
      %c0_76 = arith.constant 0 : index
      %c0_77 = arith.constant 0 : index
      %c0_78 = arith.constant 0 : index
      %71 = vector.load %arg2[%c0_76, %c0_77, %c0_78] : memref<1x32x24xbf16, #tpu.memory_space<vmem>>, vector<1x32x24xbf16>
      %72 = vector.shape_cast %71 : vector<1x32x24xbf16> to vector<32x24xbf16>
      %c0_79 = arith.constant 0 : index
      %c128_80 = arith.constant 128 : index
      %73 = vector.load %arg15[%c0_79, %c128_80] : memref<32x168xbf16, #tpu.memory_space<vmem>>, vector<32x24xbf16>
      tpu.vector_store %arg15[%c0_79, %c128_80], %72 {strides = array<i32>} : memref<32x168xbf16, #tpu.memory_space<vmem>>, vector<32x24xbf16>,
      %c0_81 = arith.constant 0 : index
      %c127_82 = arith.constant 127 : index
      %74 = vector.load %arg15[%c0_81, %c127_82] : memref<32x168xbf16, #tpu.memory_space<vmem>>, vector<32x24xbf16>
      %c0_83 = arith.constant 0 : index
      %c0_84 = arith.constant 0 : index
      %75 = vector.load %arg16[%c0_83, %c0_84] : memref<96x24xbf16, #tpu.memory_space<vmem>>, vector<32x24xbf16>
      tpu.vector_store %arg16[%c0_83, %c0_84], %74 {strides = array<i32>} : memref<96x24xbf16, #tpu.memory_space<vmem>>, vector<32x24xbf16>,
      %c0_85 = arith.constant 0 : index
      %c128_86 = arith.constant 128 : index
      %76 = vector.load %arg15[%c0_85, %c128_86] : memref<32x168xbf16, #tpu.memory_space<vmem>>, vector<32x24xbf16>
      %c32_87 = arith.constant 32 : index
      %c0_88 = arith.constant 0 : index
      %77 = vector.load %arg16[%c32_87, %c0_88] : memref<96x24xbf16, #tpu.memory_space<vmem>>, vector<32x24xbf16>
      tpu.vector_store %arg16[%c32_87, %c0_88], %76 {strides = array<i32>} : memref<96x24xbf16, #tpu.memory_space<vmem>>, vector<32x24xbf16>,
      %c0_89 = arith.constant 0 : index
      %c129_90 = arith.constant 129 : index
      %78 = vector.load %arg15[%c0_89, %c129_90] : memref<32x168xbf16, #tpu.memory_space<vmem>>, vector<32x24xbf16>
      %c64_91 = arith.constant 64 : index
      %c0_92 = arith.constant 0 : index
      %79 = vector.load %arg16[%c64_91, %c0_92] : memref<96x24xbf16, #tpu.memory_space<vmem>>, vector<32x24xbf16>
      tpu.vector_store %arg16[%c64_91, %c0_92], %78 {strides = array<i32>} : memref<96x24xbf16, #tpu.memory_space<vmem>>, vector<32x24xbf16>,
      %c0_93 = arith.constant 0 : index
      %c0_94 = arith.constant 0 : index
      %80 = vector.load %arg3[%c0_93, %c0_94] : memref<32x96xbf16, #tpu.memory_space<vmem>>, vector<32x96xbf16>
      %c0_95 = arith.constant 0 : index
      %c0_96 = arith.constant 0 : index
      %81 = vector.load %arg16[%c0_95, %c0_96] : memref<96x24xbf16, #tpu.memory_space<vmem>>, vector<96x24xbf16>
      %cst_97 = arith.constant dense<0.000000e+00> : vector<32x24xf32>
      %82 = tpu.matmul %80, %81, %cst_97 {dimension_numbers = #tpu.dot_dimension_numbers<[1], [0], [0], [1], [0, 0, 1, 1], [], []>} : vector<32x96xbf16>, vector<96x24xbf16>, vector<32x24xf32> -> vector<32x24xf32>
      %c0_98 = arith.constant 0 : index
      %c0_99 = arith.constant 0 : index
      %83 = vector.load %arg4[%c0_98, %c0_99] : memref<32x1xf32, #tpu.memory_space<vmem>>, vector<32x1xf32>
      %84 = vector.broadcast %83 : vector<32x1xf32> to vector<32x24xf32>
      %85 = arith.addf %82, %84 : vector<32x24xf32>
      %cst_100 = arith.constant dense<0.000000e+00> : vector<32xf32>
      %86 = vector.multi_reduction <add>, %85, %cst_100 [1] : vector<32x24xf32> to vector<32xf32>
      %87 = vector.shape_cast %86 : vector<32xf32> to vector<32x1xf32>
      %cst_101 = arith.constant 2.400000e+01 : f32
      %88 = vector.broadcast %cst_101 : f32 to vector<32x1xf32>
      %89 = arith.divf %87, %88 : vector<32x1xf32>
      %90 = vector.broadcast %89 : vector<32x1xf32> to vector<32x24xf32>
      %91 = arith.subf %85, %90 : vector<32x24xf32>
      %92 = arith.mulf %91, %91 : vector<32x24xf32>
      %cst_102 = arith.constant dense<0.000000e+00> : vector<32xf32>
      %93 = vector.multi_reduction <add>, %92, %cst_102 [1] : vector<32x24xf32> to vector<32xf32>
      %94 = vector.shape_cast %93 : vector<32xf32> to vector<32x1xf32>
      %cst_103 = arith.constant 2.400000e+01 : f32
      %95 = vector.broadcast %cst_103 : f32 to vector<32x1xf32>
      %96 = arith.divf %94, %95 : vector<32x1xf32>
      %cst_104 = arith.constant 9.99999974E-6 : f32
      %97 = vector.broadcast %cst_104 : f32 to vector<32x1xf32>
      %98 = arith.addf %96, %97 : vector<32x1xf32>
      %99 = math.rsqrt %98 : vector<32x1xf32>
      %100 = vector.broadcast %99 : vector<32x1xf32> to vector<32x24xf32>
      %101 = arith.mulf %91, %100 : vector<32x24xf32>
      %c0_105 = arith.constant 0 : index
      %c0_106 = arith.constant 0 : index
      %102 = vector.load %arg12[%c0_105, %c0_106] : memref<32x24xf32, #tpu.memory_space<vmem>>, vector<32x24xf32>
      tpu.vector_store %arg12[%c0_105, %c0_106], %101 {strides = array<i32>} : memref<32x24xf32, #tpu.memory_space<vmem>>, vector<32x24xf32>,
    } else {
    }
    %c0 = arith.constant 0 : index
    %c0_1 = arith.constant 0 : index
    %3 = vector.load %arg12[%c0, %c0_1] : memref<32x24xf32, #tpu.memory_space<vmem>>, vector<32x24xf32>
    %cst = arith.constant 0.000000e+00 : f32
    %4 = vector.broadcast %cst : f32 to vector<32x24xf32>
    %5 = arith.maximumf %3, %4 : vector<32x24xf32>
    %6 = arith.truncf %5 : vector<32x24xf32> to vector<32x24xbf16>
    %c0_2 = arith.constant 0 : index
    %c128 = arith.constant 128 : index
    %7 = vector.load %arg13[%c0_2, %c128] : memref<32x168xbf16, #tpu.memory_space<vmem>>, vector<32x24xbf16>
    tpu.vector_store %arg13[%c0_2, %c128], %6 {strides = array<i32>} : memref<32x168xbf16, #tpu.memory_space<vmem>>, vector<32x24xbf16>,
    %c0_3 = arith.constant 0 : index
    %c127 = arith.constant 127 : index
    %8 = vector.load %arg13[%c0_3, %c127] : memref<32x168xbf16, #tpu.memory_space<vmem>>, vector<32x24xbf16>
    %c0_4 = arith.constant 0 : index
    %c0_5 = arith.constant 0 : index
    %9 = vector.load %arg14[%c0_4, %c0_5] : memref<96x24xbf16, #tpu.memory_space<vmem>>, vector<32x24xbf16>
    tpu.vector_store %arg14[%c0_4, %c0_5], %8 {strides = array<i32>} : memref<96x24xbf16, #tpu.memory_space<vmem>>, vector<32x24xbf16>,
    %c0_6 = arith.constant 0 : index
    %c128_7 = arith.constant 128 : index
    %10 = vector.load %arg13[%c0_6, %c128_7] : memref<32x168xbf16, #tpu.memory_space<vmem>>, vector<32x24xbf16>
    %c32 = arith.constant 32 : index
    %c0_8 = arith.constant 0 : index
    %11 = vector.load %arg14[%c32, %c0_8] : memref<96x24xbf16, #tpu.memory_space<vmem>>, vector<32x24xbf16>
    tpu.vector_store %arg14[%c32, %c0_8], %10 {strides = array<i32>} : memref<96x24xbf16, #tpu.memory_space<vmem>>, vector<32x24xbf16>,
    %c0_9 = arith.constant 0 : index
    %c129 = arith.constant 129 : index
    %12 = vector.load %arg13[%c0_9, %c129] : memref<32x168xbf16, #tpu.memory_space<vmem>>, vector<32x24xbf16>
    %c64 = arith.constant 64 : index
    %c0_10 = arith.constant 0 : index
    %13 = vector.load %arg14[%c64, %c0_10] : memref<96x24xbf16, #tpu.memory_space<vmem>>, vector<32x24xbf16>
    tpu.vector_store %arg14[%c64, %c0_10], %12 {strides = array<i32>} : memref<96x24xbf16, #tpu.memory_space<vmem>>, vector<32x24xbf16>,
    %c0_11 = arith.constant 0 : index
    %c0_12 = arith.constant 0 : index
    %c0_13 = arith.constant 0 : index
    %14 = vector.load %arg5[%c0_11, %c0_12, %c0_13] : memref<1x32x96xbf16, #tpu.memory_space<vmem>>, vector<1x32x96xbf16>
    %15 = vector.shape_cast %14 : vector<1x32x96xbf16> to vector<32x96xbf16>
    %c0_14 = arith.constant 0 : index
    %c0_15 = arith.constant 0 : index
    %16 = vector.load %arg14[%c0_14, %c0_15] : memref<96x24xbf16, #tpu.memory_space<vmem>>, vector<96x24xbf16>
    %cst_16 = arith.constant dense<0.000000e+00> : vector<32x24xf32>
    %17 = tpu.matmul %15, %16, %cst_16 {dimension_numbers = #tpu.dot_dimension_numbers<[1], [0], [0], [1], [0, 0, 1, 1], [], []>} : vector<32x96xbf16>, vector<96x24xbf16>, vector<32x24xf32> -> vector<32x24xf32>
    %c0_17 = arith.constant 0 : index
    %c0_18 = arith.constant 0 : index
    %c0_19 = arith.constant 0 : index
    %18 = vector.load %arg6[%c0_17, %c0_18, %c0_19] : memref<1x32x1xf32, #tpu.memory_space<vmem>>, vector<1x32x1xf32>
    %19 = vector.shape_cast %18 : vector<1x32x1xf32> to vector<32x1xf32>
    %20 = vector.broadcast %19 : vector<32x1xf32> to vector<32x24xf32>
    %21 = arith.addf %17, %20 : vector<32x24xf32>
    %cst_20 = arith.constant 0.000000e+00 : f32
    %22 = vector.broadcast %cst_20 : f32 to vector<32x24xf32>
    %23 = arith.maximumf %21, %22 : vector<32x24xf32>
    %24 = arith.truncf %23 : vector<32x24xf32> to vector<32x24xbf16>
    %c0_21 = arith.constant 0 : index
    %c128_22 = arith.constant 128 : index
    %25 = vector.load %arg13[%c0_21, %c128_22] : memref<32x168xbf16, #tpu.memory_space<vmem>>, vector<32x24xbf16>
    tpu.vector_store %arg13[%c0_21, %c128_22], %24 {strides = array<i32>} : memref<32x168xbf16, #tpu.memory_space<vmem>>, vector<32x24xbf16>,
    %c0_23 = arith.constant 0 : index
    %c125 = arith.constant 125 : index
    %26 = vector.load %arg13[%c0_23, %c125] : memref<32x168xbf16, #tpu.memory_space<vmem>>, vector<32x24xbf16>
    %c0_24 = arith.constant 0 : index
    %c0_25 = arith.constant 0 : index
    %27 = vector.load %arg14[%c0_24, %c0_25] : memref<96x24xbf16, #tpu.memory_space<vmem>>, vector<32x24xbf16>
    tpu.vector_store %arg14[%c0_24, %c0_25], %26 {strides = array<i32>} : memref<96x24xbf16, #tpu.memory_space<vmem>>, vector<32x24xbf16>,
    %c0_26 = arith.constant 0 : index
    %c128_27 = arith.constant 128 : index
    %28 = vector.load %arg13[%c0_26, %c128_27] : memref<32x168xbf16, #tpu.memory_space<vmem>>, vector<32x24xbf16>
    %c32_28 = arith.constant 32 : index
    %c0_29 = arith.constant 0 : index
    %29 = vector.load %arg14[%c32_28, %c0_29] : memref<96x24xbf16, #tpu.memory_space<vmem>>, vector<32x24xbf16>
    tpu.vector_store %arg14[%c32_28, %c0_29], %28 {strides = array<i32>} : memref<96x24xbf16, #tpu.memory_space<vmem>>, vector<32x24xbf16>,
    %c0_30 = arith.constant 0 : index
    %c131 = arith.constant 131 : index
    %30 = vector.load %arg13[%c0_30, %c131] : memref<32x168xbf16, #tpu.memory_space<vmem>>, vector<32x24xbf16>
    %c64_31 = arith.constant 64 : index
    %c0_32 = arith.constant 0 : index
    %31 = vector.load %arg14[%c64_31, %c0_32] : memref<96x24xbf16, #tpu.memory_space<vmem>>, vector<32x24xbf16>
    tpu.vector_store %arg14[%c64_31, %c0_32], %30 {strides = array<i32>} : memref<96x24xbf16, #tpu.memory_space<vmem>>, vector<32x24xbf16>,
    %c0_33 = arith.constant 0 : index
    %c0_34 = arith.constant 0 : index
    %c0_35 = arith.constant 0 : index
    %32 = vector.load %arg7[%c0_33, %c0_34, %c0_35] : memref<1x32x96xbf16, #tpu.memory_space<vmem>>, vector<1x32x96xbf16>
    %33 = vector.shape_cast %32 : vector<1x32x96xbf16> to vector<32x96xbf16>
    %c0_36 = arith.constant 0 : index
    %c0_37 = arith.constant 0 : index
    %34 = vector.load %arg14[%c0_36, %c0_37] : memref<96x24xbf16, #tpu.memory_space<vmem>>, vector<96x24xbf16>
    %cst_38 = arith.constant dense<0.000000e+00> : vector<32x24xf32>
    %35 = tpu.matmul %33, %34, %cst_38 {dimension_numbers = #tpu.dot_dimension_numbers<[1], [0], [0], [1], [0, 0, 1, 1], [], []>} : vector<32x96xbf16>, vector<96x24xbf16>, vector<32x24xf32> -> vector<32x24xf32>
    %c0_39 = arith.constant 0 : index
    %c0_40 = arith.constant 0 : index
    %c0_41 = arith.constant 0 : index
    %36 = vector.load %arg8[%c0_39, %c0_40, %c0_41] : memref<1x32x1xf32, #tpu.memory_space<vmem>>, vector<1x32x1xf32>
    %37 = vector.shape_cast %36 : vector<1x32x1xf32> to vector<32x1xf32>
    %38 = vector.broadcast %37 : vector<32x1xf32> to vector<32x24xf32>
    %39 = arith.addf %35, %38 : vector<32x24xf32>
    %cst_42 = arith.constant 0.000000e+00 : f32
    %40 = vector.broadcast %cst_42 : f32 to vector<32x24xf32>
    %41 = arith.maximumf %39, %40 : vector<32x24xf32>
    %42 = arith.truncf %41 : vector<32x24xf32> to vector<32x24xbf16>
    %c0_43 = arith.constant 0 : index
    %c128_44 = arith.constant 128 : index
    %43 = vector.load %arg13[%c0_43, %c128_44] : memref<32x168xbf16, #tpu.memory_space<vmem>>, vector<32x24xbf16>
    tpu.vector_store %arg13[%c0_43, %c128_44], %42 {strides = array<i32>} : memref<32x168xbf16, #tpu.memory_space<vmem>>, vector<32x24xbf16>,
    %c0_45 = arith.constant 0 : index
    %c119 = arith.constant 119 : index
    %44 = vector.load %arg13[%c0_45, %c119] : memref<32x168xbf16, #tpu.memory_space<vmem>>, vector<32x24xbf16>
    %c0_46 = arith.constant 0 : index
    %c0_47 = arith.constant 0 : index
    %45 = vector.load %arg14[%c0_46, %c0_47] : memref<96x24xbf16, #tpu.memory_space<vmem>>, vector<32x24xbf16>
    tpu.vector_store %arg14[%c0_46, %c0_47], %44 {strides = array<i32>} : memref<96x24xbf16, #tpu.memory_space<vmem>>, vector<32x24xbf16>,
    %c0_48 = arith.constant 0 : index
    %c128_49 = arith.constant 128 : index
    %46 = vector.load %arg13[%c0_48, %c128_49] : memref<32x168xbf16, #tpu.memory_space<vmem>>, vector<32x24xbf16>
    %c32_50 = arith.constant 32 : index
    %c0_51 = arith.constant 0 : index
    %47 = vector.load %arg14[%c32_50, %c0_51] : memref<96x24xbf16, #tpu.memory_space<vmem>>, vector<32x24xbf16>
    tpu.vector_store %arg14[%c32_50, %c0_51], %46 {strides = array<i32>} : memref<96x24xbf16, #tpu.memory_space<vmem>>, vector<32x24xbf16>,
    %c0_52 = arith.constant 0 : index
    %c137 = arith.constant 137 : index
    %48 = vector.load %arg13[%c0_52, %c137] : memref<32x168xbf16, #tpu.memory_space<vmem>>, vector<32x24xbf16>
    %c64_53 = arith.constant 64 : index
    %c0_54 = arith.constant 0 : index
    %49 = vector.load %arg14[%c64_53, %c0_54] : memref<96x24xbf16, #tpu.memory_space<vmem>>, vector<32x24xbf16>
    tpu.vector_store %arg14[%c64_53, %c0_54], %48 {strides = array<i32>} : memref<96x24xbf16, #tpu.memory_space<vmem>>, vector<32x24xbf16>,
    %c0_55 = arith.constant 0 : index
    %c0_56 = arith.constant 0 : index
    %c0_57 = arith.constant 0 : index
    %50 = vector.load %arg9[%c0_55, %c0_56, %c0_57] : memref<1x32x96xbf16, #tpu.memory_space<vmem>>, vector<1x32x96xbf16>
    %51 = vector.shape_cast %50 : vector<1x32x96xbf16> to vector<32x96xbf16>
    %c0_58 = arith.constant 0 : index
    %c0_59 = arith.constant 0 : index
    %52 = vector.load %arg14[%c0_58, %c0_59] : memref<96x24xbf16, #tpu.memory_space<vmem>>, vector<96x24xbf16>
    %cst_60 = arith.constant dense<0.000000e+00> : vector<32x24xf32>
    %53 = tpu.matmul %51, %52, %cst_60 {dimension_numbers = #tpu.dot_dimension_numbers<[1], [0], [0], [1], [0, 0, 1, 1], [], []>} : vector<32x96xbf16>, vector<96x24xbf16>, vector<32x24xf32> -> vector<32x24xf32>
    %c0_61 = arith.constant 0 : index
    %c0_62 = arith.constant 0 : index
    %c0_63 = arith.constant 0 : index
    %54 = vector.load %arg10[%c0_61, %c0_62, %c0_63] : memref<1x32x1xf32, #tpu.memory_space<vmem>>, vector<1x32x1xf32>
    %55 = vector.shape_cast %54 : vector<1x32x1xf32> to vector<32x1xf32>
    %56 = vector.broadcast %55 : vector<32x1xf32> to vector<32x24xf32>
    %57 = arith.addf %53, %56 : vector<32x24xf32>
    %58 = arith.addf %57, %3 : vector<32x24xf32>
    %cst_64 = arith.constant 0.000000e+00 : f32
    %59 = vector.broadcast %cst_64 : f32 to vector<32x24xf32>
    %60 = arith.maximumf %58, %59 : vector<32x24xf32>
    %c0_65 = arith.constant 0 : index
    %c0_66 = arith.constant 0 : index
    %61 = vector.load %arg12[%c0_65, %c0_66] : memref<32x24xf32, #tpu.memory_space<vmem>>, vector<32x24xf32>
    tpu.vector_store %arg12[%c0_65, %c0_66], %60 {strides = array<i32>} : memref<32x24xf32, #tpu.memory_space<vmem>>, vector<32x24xf32>,
    %c2_i32 = arith.constant 2 : i32
    %62 = arith.cmpi eq, %arg1, %c2_i32 : i32
    %63 = arith.extui %62 : i1 to i32
    %c0_i32_67 = arith.constant 0 : i32
    %64 = arith.cmpi ne, %63, %c0_i32_67 : i32
    scf.if %64 {
      %c0_68 = arith.constant 0 : index
      %c0_69 = arith.constant 0 : index
      %65 = vector.load %arg12[%c0_68, %c0_69] : memref<32x24xf32, #tpu.memory_space<vmem>>, vector<32x24xf32>
      %cst_70 = arith.constant dense<0xFF800000> : vector<32xf32>
      %66 = vector.multi_reduction <maximumf>, %65, %cst_70 [1] : vector<32x24xf32> to vector<32xf32>
      %67 = vector.shape_cast %66 : vector<32xf32> to vector<32x1xf32>
      %c0_71 = arith.constant 0 : index
      %c0_72 = arith.constant 0 : index
      %c0_73 = arith.constant 0 : index
      %68 = vector.load %arg11[%c0_71, %c0_72, %c0_73] : memref<1x32x1xf32, #tpu.memory_space<vmem>>, vector<1x32x1xf32>
      %69 = vector.shape_cast %68 : vector<1x32x1xf32> to vector<32x1xf32>
      %70 = vector.shape_cast %67 : vector<32x1xf32> to vector<1x32x1xf32>
      tpu.vector_store %arg11[%c0_71, %c0_72, %c0_73], %70 {strides = array<i32>} : memref<1x32x1xf32, #tpu.memory_space<vmem>>, vector<1x32x1xf32>,
    } else {
    }
    return
  }
  func.func @transform_0(%arg0: i32, %arg1: i32) -> (i32, i32, i32) {
    %c0_i32 = arith.constant 0 : i32
    %c0_i32_0 = arith.constant 0 : i32
    %c0_i32_1 = arith.constant 0 : i32
    return %arg0, %c0_i32, %c0_i32_0 : i32, i32, i32
  }
  func.func @transform_1(%arg0: i32, %arg1: i32) -> (i32, i32) {
    %c0_i32 = arith.constant 0 : i32
    %c0_i32_0 = arith.constant 0 : i32
    %c0_i32_1 = arith.constant 0 : i32
    return %c0_i32, %c0_i32_0 : i32, i32
  }
  func.func @transform_2(%arg0: i32, %arg1: i32) -> (i32, i32) {
    %c0_i32 = arith.constant 0 : i32
    %c0_i32_0 = arith.constant 0 : i32
    %c0_i32_1 = arith.constant 0 : i32
    return %c0_i32, %c0_i32_0 : i32, i32
  }
  func.func @transform_3(%arg0: i32, %arg1: i32) -> (i32, i32, i32) {
    %c0_i32 = arith.constant 0 : i32
    %c0_i32_0 = arith.constant 0 : i32
    %c0_i32_1 = arith.constant 0 : i32
    return %arg1, %c0_i32, %c0_i32_0 : i32, i32, i32
  }
  func.func @transform_4(%arg0: i32, %arg1: i32) -> (i32, i32, i32) {
    %c0_i32 = arith.constant 0 : i32
    %c0_i32_0 = arith.constant 0 : i32
    %c0_i32_1 = arith.constant 0 : i32
    return %arg1, %c0_i32, %c0_i32_0 : i32, i32, i32
  }
  func.func @transform_5(%arg0: i32, %arg1: i32) -> (i32, i32, i32) {
    %c0_i32 = arith.constant 0 : i32
    %c0_i32_0 = arith.constant 0 : i32
    %c0_i32_1 = arith.constant 0 : i32
    return %arg1, %c0_i32, %c0_i32_0 : i32, i32, i32
  }
  func.func @transform_6(%arg0: i32, %arg1: i32) -> (i32, i32, i32) {
    %c0_i32 = arith.constant 0 : i32
    %c0_i32_0 = arith.constant 0 : i32
    %c0_i32_1 = arith.constant 0 : i32
    return %arg1, %c0_i32, %c0_i32_0 : i32, i32, i32
  }
  func.func @transform_7(%arg0: i32, %arg1: i32) -> (i32, i32, i32) {
    %c0_i32 = arith.constant 0 : i32
    %c0_i32_0 = arith.constant 0 : i32
    %c0_i32_1 = arith.constant 0 : i32
    return %arg1, %c0_i32, %c0_i32_0 : i32, i32, i32
  }
  func.func @transform_8(%arg0: i32, %arg1: i32) -> (i32, i32, i32) {
    %c0_i32 = arith.constant 0 : i32
    %c0_i32_0 = arith.constant 0 : i32
    %c0_i32_1 = arith.constant 0 : i32
    return %arg1, %c0_i32, %c0_i32_0 : i32, i32, i32
  }
  func.func @transform_9(%arg0: i32, %arg1: i32) -> (i32, i32, i32) {
    %c0_i32 = arith.constant 0 : i32
    %c0_i32_0 = arith.constant 0 : i32
    %c0_i32_1 = arith.constant 0 : i32
    return %arg0, %c0_i32, %c0_i32_0 : i32, i32, i32
  }
}

</mosaic_0001>

<llo_original>
// kernel: tpu_custom_call.1
$region0: #{tpu_custom_call.1}
  #allocation0 [shape = 'u32[]', space=smem, size = 0x4, offset = 0x4, fixed_abs, tag = 'smem constant byte address 0x4 - core index']
  #allocation1 [shape = 'u32[144,128]{1,0:T(1,128)}', space=vmem, size = 0x12000, scoped, tag = 'internal scratch']
  #allocation2 [shape = 'f32[32,24]{1,0:T(8,128)}', space=vmem, size = 0x4000, scoped, tag = 'scratch operand']
  #allocation3 [shape = 'bf16[32,168]{1,0:T(8,128)(2,1)}', space=vmem, size = 0x4000, scoped, tag = 'scratch operand']
  #allocation4 [shape = 'bf16[96,24]{1,0:T(8,128)(2,1)}', space=vmem, size = 0x6000, scoped, tag = 'scratch operand']
  #allocation5 [shape = 'bf16[32,168]{1,0:T(8,128)(2,1)}', space=vmem, size = 0x4000, scoped, tag = 'scratch operand']
  #allocation6 [shape = 'bf16[96,24]{1,0:T(8,128)(2,1)}', space=vmem, size = 0x6000, scoped, tag = 'scratch operand']
  %s0 = inlined_call_operand.vmem [shape: bf16[2,32,24], index: 0, kind: input, shape index: {}]
  %s1 = inlined_call_operand.vmem [shape: bf16[32,96], index: 1, kind: input, shape index: {}]
  %s2 = inlined_call_operand.vmem [shape: f32[32,1], index: 2, kind: input, shape index: {}]
  %s3 = inlined_call_operand.vmem [shape: bf16[3,32,96], index: 3, kind: input, shape index: {}]
  %s4 = inlined_call_operand.vmem [shape: f32[3,32,1], index: 4, kind: input, shape index: {}]
  %s5 = inlined_call_operand.vmem [shape: bf16[3,32,96], index: 5, kind: input, shape index: {}]
  %s6 = inlined_call_operand.vmem [shape: f32[3,32,1], index: 6, kind: input, shape index: {}]
  %s7 = inlined_call_operand.vmem [shape: bf16[3,32,96], index: 7, kind: input, shape index: {}]
  %s8 = inlined_call_operand.vmem [shape: f32[3,32,1], index: 8, kind: input, shape index: {}]
  %s9 = inlined_call_operand.vmem [shape: f32[2,32,1], index: 9, kind: output, shape index: {}]
  %s10 = sld [smem:[#allocation0]]
  $region77: #{tpu_custom_call.1} parent=0
    _
  %s12 = ssub.s32 1, %s10
  %s13 = scalar_select 0, %s12, %s10
  loop: start=0, step=1, limit=8
  $region2: #{tpu_custom_call.1} parent=0 // loop_pre_header
    _
  $region3: #{tpu_custom_call.1} parent=0 // loop_header
    %s15 = sphi 0, %s19
    %p16 = scmp.ge.s32.totalorder %s15, 8
    %s22 = sphi 0, %s34
    %s23 = sphi 0, %s30
    %s24 = sphi 0, %s22
    %s25 = sphi 0, %s23
    %s26 = sphi 0, %s24
    %s27 = sphi 0, %s25
    %s37 = sphi 0, %s39
    %s40 = sphi 0, %s37
    %s41 = sphi 0, %s40
    %s57 = sphi 0, %s41
    %s61 = sphi 0, %s61
    %s63 = sphi 0, %s61
    %s64 = sphi 0, %s63
    %s78 = sphi 0, %s64
    %s82 = sphi 0, %s82
    %s84 = sphi 0, %s82
    %s85 = sphi 0, %s84
    %s99 = sphi 0, %s85
    %s105 = sphi 0, %s107
    %s108 = sphi 0, %s105
    %s109 = sphi 0, %s108
    %s125 = sphi 0, %s109
    %s131 = sphi 0, %s133
    %s134 = sphi 0, %s131
    %s135 = sphi 0, %s134
    %s151 = sphi 0, %s135
    %s157 = sphi 0, %s159
    %s160 = sphi 0, %s157
    %s161 = sphi 0, %s160
    %s177 = sphi 0, %s161
    %s183 = sphi 0, %s185
    %s186 = sphi 0, %s183
    %s187 = sphi 0, %s186
    %s203 = sphi 0, %s187
    %s209 = sphi 0, %s211
    %s212 = sphi 0, %s209
    %s213 = sphi 0, %s212
    %s229 = sphi 0, %s213
    %s235 = sphi 0, %s237
    %s238 = sphi 0, %s235
    %s239 = sphi 0, %s238
    %s255 = sphi 0, %s239
    %s261 = sphi 0, %s263
    %s264 = sphi 0, %s261
    %s265 = sphi 0, %s264
    %s281 = sphi 0, %s265
  $region4: #{tpu_custom_call.1} parent=0 // loop_header_branch
    %18 = sbr.rel (%p16) target = $region8
  $region5: #{tpu_custom_call.1} parent=0 // loop_body
    %s20 = ssub.s32 %s15, 1
    %s21 = ssub.s32 %s15, 2
    %s28 = sadd.s32 1, %s23
    %p29 = scmp.ge.s32.totalorder %s28, 3
    %s30 = scalar_select %p29, 0, %s28
    %s31 = sadd.s32 1, %s22
    %s32 = scalar_select %p29, %s31, %s22
    %p33 = scmp.ge.s32.totalorder %s32, 2
    %s34 = scalar_select %p33, 0, %s32
    %s35 = ssub.s32 %s22, %s34
    %p36 = scmp.eq.s32.totalorder %s35, 0
    %s38 = sadd.s32 %s37, 1
    %s39 = scalar_select %p36, %s37, %s38
    %p42 = pneg %p36
    %p43 = scmp.eq.s32.totalorder %s15, 5
    %p44 = por %p42, %p43
    %p45 = scmp.ne.s32.totalorder %s37, %s40
    %p46 = scmp.eq.s32.totalorder %s15, 0
    %p47 = por %p45, %p46
    %p48 = scmp.ne.s32.totalorder %s37, %s40
    %p49 = scmp.eq.s32.totalorder %s20, 5
    %p50 = por %p48, %p49
    %p51 = scmp.ne.s32.totalorder %s40, %s41
    %p52 = scmp.eq.s32.totalorder %s20, 0
    %p53 = por %p51, %p52
    %p54 = scmp.ne.s32.totalorder %s40, %s41
    %p55 = scmp.eq.s32.totalorder %s21, 5
    %p56 = por %p54, %p55
    %p58 = scmp.ne.s32.totalorder %s41, %s57
    %p59 = scmp.eq.s32.totalorder %s21, 0
    %p60 = por %p58, %p59
    %s62 = sadd.s32 %s61, 1
    %p65 = scmp.eq.s32.totalorder %s15, 5
    %p66 = scmp.ne.s32.totalorder %s61, %s63
    %p67 = scmp.eq.s32.totalorder %s15, 0
    %p68 = por %p66, %p67
    %p69 = scmp.ne.s32.totalorder %s61, %s63
    %p70 = scmp.eq.s32.totalorder %s20, 5
    %p71 = por %p69, %p70
    %p72 = scmp.ne.s32.totalorder %s63, %s64
    %p73 = scmp.eq.s32.totalorder %s20, 0
    %p74 = por %p72, %p73
    %p75 = scmp.ne.s32.totalorder %s63, %s64
    %p76 = scmp.eq.s32.totalorder %s21, 5
    %p77 = por %p75, %p76
    %p79 = scmp.ne.s32.totalorder %s64, %s78
    %p80 = scmp.eq.s32.totalorder %s21, 0
    %p81 = por %p79, %p80
    %s83 = sadd.s32 %s82, 1
    %p86 = scmp.eq.s32.totalorder %s15, 5
    %p87 = scmp.ne.s32.totalorder %s82, %s84
    %p88 = scmp.eq.s32.totalorder %s15, 0
    %p89 = por %p87, %p88
    %p90 = scmp.ne.s32.totalorder %s82, %s84
    %p91 = scmp.eq.s32.totalorder %s20, 5
    %p92 = por %p90, %p91
    %p93 = scmp.ne.s32.totalorder %s84, %s85
    %p94 = scmp.eq.s32.totalorder %s20, 0
    %p95 = por %p93, %p94
    %p96 = scmp.ne.s32.totalorder %s84, %s85
    %p97 = scmp.eq.s32.totalorder %s21, 5
    %p98 = por %p96, %p97
    %p100 = scmp.ne.s32.totalorder %s85, %s99
    %p101 = scmp.eq.s32.totalorder %s21, 0
    %p102 = por %p100, %p101
    %s103 = ssub.s32 %s23, %s30
    %p104 = scmp.eq.s32.totalorder %s103, 0
    %s106 = sadd.s32 %s105, 1
    %s107 = scalar_select %p104, %s105, %s106
    %p110 = pneg %p104
    %p111 = scmp.eq.s32.totalorder %s15, 5
    %p112 = por %p110, %p111
    %p113 = scmp.ne.s32.totalorder %s105, %s108
    %p114 = scmp.eq.s32.totalorder %s15, 0
    %p115 = por %p113, %p114
    %p116 = scmp.ne.s32.totalorder %s105, %s108
    %p117 = scmp.eq.s32.totalorder %s20, 5
    %p118 = por %p116, %p117
    %p119 = scmp.ne.s32.totalorder %s108, %s109
    %p120 = scmp.eq.s32.totalorder %s20, 0
    %p121 = por %p119, %p120
    %p122 = scmp.ne.s32.totalorder %s108, %s109
    %p123 = scmp.eq.s32.totalorder %s21, 5
    %p124 = por %p122, %p123
    %p126 = scmp.ne.s32.totalorder %s109, %s125
    %p127 = scmp.eq.s32.totalorder %s21, 0
    %p128 = por %p126, %p127
    %s129 = ssub.s32 %s23, %s30
    %p130 = scmp.eq.s32.totalorder %s129, 0
    %s132 = sadd.s32 %s131, 1
    %s133 = scalar_select %p130, %s131, %s132
    %p136 = pneg %p130
    %p137 = scmp.eq.s32.totalorder %s15, 5
    %p138 = por %p136, %p137
    %p139 = scmp.ne.s32.totalorder %s131, %s134
    %p140 = scmp.eq.s32.totalorder %s15, 0
    %p141 = por %p139, %p140
    %p142 = scmp.ne.s32.totalorder %s131, %s134
    %p143 = scmp.eq.s32.totalorder %s20, 5
    %p144 = por %p142, %p143
    %p145 = scmp.ne.s32.totalorder %s134, %s135
    %p146 = scmp.eq.s32.totalorder %s20, 0
    %p147 = por %p145, %p146
    %p148 = scmp.ne.s32.totalorder %s134, %s135
    %p149 = scmp.eq.s32.totalorder %s21, 5
    %p150 = por %p148, %p149
    %p152 = scmp.ne.s32.totalorder %s135, %s151
    %p153 = scmp.eq.s32.totalorder %s21, 0
    %p154 = por %p152, %p153
    %s155 = ssub.s32 %s23, %s30
    %p156 = scmp.eq.s32.totalorder %s155, 0
    %s158 = sadd.s32 %s157, 1
    %s159 = scalar_select %p156, %s157, %s158
    %p162 = pneg %p156
    %p163 = scmp.eq.s32.totalorder %s15, 5
    %p164 = por %p162, %p163
    %p165 = scmp.ne.s32.totalorder %s157, %s160
    %p166 = scmp.eq.s32.totalorder %s15, 0
    %p167 = por %p165, %p166
    %p168 = scmp.ne.s32.totalorder %s157, %s160
    %p169 = scmp.eq.s32.totalorder %s20, 5
    %p170 = por %p168, %p169
    %p171 = scmp.ne.s32.totalorder %s160, %s161
    %p172 = scmp.eq.s32.totalorder %s20, 0
    %p173 = por %p171, %p172
    %p174 = scmp.ne.s32.totalorder %s160, %s161
    %p175 = scmp.eq.s32.totalorder %s21, 5
    %p176 = por %p174, %p175
    %p178 = scmp.ne.s32.totalorder %s161, %s177
    %p179 = scmp.eq.s32.totalorder %s21, 0
    %p180 = por %p178, %p179
    %s181 = ssub.s32 %s23, %s30
    %p182 = scmp.eq.s32.totalorder %s181, 0
    %s184 = sadd.s32 %s183, 1
    %s185 = scalar_select %p182, %s183, %s184
    %p188 = pneg %p182
    %p189 = scmp.eq.s32.totalorder %s15, 5
    %p190 = por %p188, %p189
    %p191 = scmp.ne.s32.totalorder %s183, %s186
    %p192 = scmp.eq.s32.totalorder %s15, 0
    %p193 = por %p191, %p192
    %p194 = scmp.ne.s32.totalorder %s183, %s186
    %p195 = scmp.eq.s32.totalorder %s20, 5
    %p196 = por %p194, %p195
    %p197 = scmp.ne.s32.totalorder %s186, %s187
    %p198 = scmp.eq.s32.totalorder %s20, 0
    %p199 = por %p197, %p198
    %p200 = scmp.ne.s32.totalorder %s186, %s187
    %p201 = scmp.eq.s32.totalorder %s21, 5
    %p202 = por %p200, %p201
    %p204 = scmp.ne.s32.totalorder %s187, %s203
    %p205 = scmp.eq.s32.totalorder %s21, 0
    %p206 = por %p204, %p205
    %s207 = ssub.s32 %s23, %s30
    %p208 = scmp.eq.s32.totalorder %s207, 0
    %s210 = sadd.s32 %s209, 1
    %s211 = scalar_select %p208, %s209, %s210
    %p214 = pneg %p208
    %p215 = scmp.eq.s32.totalorder %s15, 5
    %p216 = por %p214, %p215
    %p217 = scmp.ne.s32.totalorder %s209, %s212
    %p218 = scmp.eq.s32.totalorder %s15, 0
    %p219 = por %p217, %p218
    %p220 = scmp.ne.s32.totalorder %s209, %s212
    %p221 = scmp.eq.s32.totalorder %s20, 5
    %p222 = por %p220, %p221
    %p223 = scmp.ne.s32.totalorder %s212, %s213
    %p224 = scmp.eq.s32.totalorder %s20, 0
    %p225 = por %p223, %p224
    %p226 = scmp.ne.s32.totalorder %s212, %s213
    %p227 = scmp.eq.s32.totalorder %s21, 5
    %p228 = por %p226, %p227
    %p230 = scmp.ne.s32.totalorder %s213, %s229
    %p231 = scmp.eq.s32.totalorder %s21, 0
    %p232 = por %p230, %p231
    %s233 = ssub.s32 %s23, %s30
    %p234 = scmp.eq.s32.totalorder %s233, 0
    %s236 = sadd.s32 %s235, 1
    %s237 = scalar_select %p234, %s235, %s236
    %p240 = pneg %p234
    %p241 = scmp.eq.s32.totalorder %s15, 5
    %p242 = por %p240, %p241
    %p243 = scmp.ne.s32.totalorder %s235, %s238
    %p244 = scmp.eq.s32.totalorder %s15, 0
    %p245 = por %p243, %p244
    %p246 = scmp.ne.s32.totalorder %s235, %s238
    %p247 = scmp.eq.s32.totalorder %s20, 5
    %p248 = por %p246, %p247
    %p249 = scmp.ne.s32.totalorder %s238, %s239
    %p250 = scmp.eq.s32.totalorder %s20, 0
    %p251 = por %p249, %p250
    %p252 = scmp.ne.s32.totalorder %s238, %s239
    %p253 = scmp.eq.s32.totalorder %s21, 5
    %p254 = por %p252, %p253
    %p256 = scmp.ne.s32.totalorder %s239, %s255
    %p257 = scmp.eq.s32.totalorder %s21, 0
    %p258 = por %p256, %p257
    %s259 = ssub.s32 %s22, %s34
    %p260 = scmp.eq.s32.totalorder %s259, 0
    %s262 = sadd.s32 %s261, 1
    %s263 = scalar_select %p260, %s261, %s262
    %p266 = pneg %p260
    %p267 = scmp.eq.s32.totalorder %s15, 5
    %p268 = por %p266, %p267
    %p269 = scmp.ne.s32.totalorder %s261, %s264
    %p270 = scmp.eq.s32.totalorder %s15, 0
    %p271 = por %p269, %p270
    %p272 = scmp.ne.s32.totalorder %s261, %s264
    %p273 = scmp.eq.s32.totalorder %s20, 5
    %p274 = por %p272, %p273
    %p275 = scmp.ne.s32.totalorder %s264, %s265
    %p276 = scmp.eq.s32.totalorder %s20, 0
    %p277 = por %p275, %p276
    %p278 = scmp.ne.s32.totalorder %s264, %s265
    %p279 = scmp.eq.s32.totalorder %s21, 5
    %p280 = por %p278, %p279
    %p282 = scmp.ne.s32.totalorder %s265, %s281
    %p283 = scmp.eq.s32.totalorder %s21, 0
    %p284 = por %p282, %p283
    %p285 = scmp.le.s32.totalorder 1, %s15
    %p286 = scmp.lt.s32.totalorder %s15, 7
    %p287 = pnand %p285, %p286
    %p288 = pneg %p287
    // Predicated region
    $region9: #{tpu_custom_call.1} parent=5 // pred_check
      _
    $region10: #{tpu_custom_call.1} parent=5 // pred_check_branch
      %290 = sbr.rel (%p287) target = $region12
    $region11: #{tpu_custom_call.1} parent=5 // pred_region
      %s291 = ssub.s32 %s15, 1
      // Predicated region
      $region13: #{tpu_custom_call.1} parent=11 // pred_check
        %p292 = pneg %p74
      $region14: #{tpu_custom_call.1} parent=11 // pred_check_branch
        %294 = sbr.rel (%p292) target = $region16
      $region15: #{tpu_custom_call.1} parent=11 // pred_region
        _
      $region16: #{tpu_custom_call.1} parent=11 // pred_fallthru
        _
      // Predicated region
      $region17: #{tpu_custom_call.1} parent=11 // pred_check
        %p295 = pneg %p95
      $region18: #{tpu_custom_call.1} parent=11 // pred_check_branch
        %297 = sbr.rel (%p295) target = $region20
      $region19: #{tpu_custom_call.1} parent=11 // pred_region
        _
      $region20: #{tpu_custom_call.1} parent=11 // pred_fallthru
        _
    $region12: #{tpu_custom_call.1} parent=5 // pred_fallthru
      _
    %p298 = scmp.lt.s32.totalorder %s15, 6
    // Predicated region
    $region21: #{tpu_custom_call.1} parent=5 // pred_check
      %p299 = pneg %p298
    $region22: #{tpu_custom_call.1} parent=5 // pred_check_branch
      %301 = sbr.rel (%p299) target = $region24
    $region23: #{tpu_custom_call.1} parent=5 // pred_region
      // Predicated region
      $region25: #{tpu_custom_call.1} parent=23 // pred_check
        %p302 = pneg %p47
      $region26: #{tpu_custom_call.1} parent=23 // pred_check_branch
        %304 = sbr.rel (%p302) target = $region28
      $region27: #{tpu_custom_call.1} parent=23 // pred_region
        %p305 = scmp.lt.s32.totalorder %s22, 1
        %s306 = scalar_select %p305, %s22, 1
        %s307 = smul.addr %s306, 4
        %s308 = smul.addr %s307, 4
        %s309 = scalar_lea.vmem %s0, %s308
      $region28: #{tpu_custom_call.1} parent=23 // pred_fallthru
        _
      // Predicated region
      $region29: #{tpu_custom_call.1} parent=23 // pred_check
        %p310 = pneg %p115
      $region30: #{tpu_custom_call.1} parent=23 // pred_check_branch
        %312 = sbr.rel (%p310) target = $region32
      $region31: #{tpu_custom_call.1} parent=23 // pred_region
        %p313 = scmp.lt.s32.totalorder %s23, 2
        %s314 = scalar_select %p313, %s23, 2
        %s315 = smul.addr %s314, 4
        %s316 = smul.addr %s315, 4
        %s317 = scalar_lea.vmem %s3, %s316
      $region32: #{tpu_custom_call.1} parent=23 // pred_fallthru
        _
      // Predicated region
      $region33: #{tpu_custom_call.1} parent=23 // pred_check
        %p318 = pneg %p141
      $region34: #{tpu_custom_call.1} parent=23 // pred_check_branch
        %320 = sbr.rel (%p318) target = $region36
      $region35: #{tpu_custom_call.1} parent=23 // pred_region
        %p321 = scmp.lt.s32.totalorder %s23, 2
        %s322 = scalar_select %p321, %s23, 2
        %s323 = smul.addr %s322, 4
        %s324 = smul.addr %s323, 8
        %s325 = scalar_lea.vmem %s4, %s324
      $region36: #{tpu_custom_call.1} parent=23 // pred_fallthru
        _
      // Predicated region
      $region37: #{tpu_custom_call.1} parent=23 // pred_check
        %p326 = pneg %p167
      $region38: #{tpu_custom_call.1} parent=23 // pred_check_branch
        %328 = sbr.rel (%p326) target = $region40
      $region39: #{tpu_custom_call.1} parent=23 // pred_region
        %p329 = scmp.lt.s32.totalorder %s23, 2
        %s330 = scalar_select %p329, %s23, 2
        %s331 = smul.addr %s330, 4
        %s332 = smul.addr %s331, 4
        %s333 = scalar_lea.vmem %s5, %s332
      $region40: #{tpu_custom_call.1} parent=23 // pred_fallthru
        _
      // Predicated region
      $region41: #{tpu_custom_call.1} parent=23 // pred_check
        %p334 = pneg %p193
      $region42: #{tpu_custom_call.1} parent=23 // pred_check_branch
        %336 = sbr.rel (%p334) target = $region44
      $region43: #{tpu_custom_call.1} parent=23 // pred_region
        %p337 = scmp.lt.s32.totalorder %s23, 2
        %s338 = scalar_select %p337, %s23, 2
        %s339 = smul.addr %s338, 4
        %s340 = smul.addr %s339, 8
        %s341 = scalar_lea.vmem %s6, %s340
      $region44: #{tpu_custom_call.1} parent=23 // pred_fallthru
        _
      // Predicated region
      $region45: #{tpu_custom_call.1} parent=23 // pred_check
        %p342 = pneg %p219
      $region46: #{tpu_custom_call.1} parent=23 // pred_check_branch
        %344 = sbr.rel (%p342) target = $region48
      $region47: #{tpu_custom_call.1} parent=23 // pred_region
        %p345 = scmp.lt.s32.totalorder %s23, 2
        %s346 = scalar_select %p345, %s23, 2
        %s347 = smul.addr %s346, 4
        %s348 = smul.addr %s347, 4
        %s349 = scalar_lea.vmem %s7, %s348
      $region48: #{tpu_custom_call.1} parent=23 // pred_fallthru
        _
      // Predicated region
      $region49: #{tpu_custom_call.1} parent=23 // pred_check
        %p350 = pneg %p245
      $region50: #{tpu_custom_call.1} parent=23 // pred_check_branch
        %352 = sbr.rel (%p350) target = $region52
      $region51: #{tpu_custom_call.1} parent=23 // pred_region
        %p353 = scmp.lt.s32.totalorder %s23, 2
        %s354 = scalar_select %p353, %s23, 2
        %s355 = smul.addr %s354, 4
        %s356 = smul.addr %s355, 8
        %s357 = scalar_lea.vmem %s8, %s356
      $region52: #{tpu_custom_call.1} parent=23 // pred_fallthru
        _
    $region24: #{tpu_custom_call.1} parent=5 // pred_fallthru
      _
    %p358 = scmp.le.s32.totalorder 1, %s15
    %p359 = scmp.lt.s32.totalorder %s15, 7
    %p360 = pnand %p358, %p359
    %p361 = pneg %p360
    // Predicated region
    $region53: #{tpu_custom_call.1} parent=5 // pred_check
      _
    $region54: #{tpu_custom_call.1} parent=5 // pred_check_branch
      %363 = sbr.rel (%p360) target = $region56
    $region55: #{tpu_custom_call.1} parent=5 // pred_region
      %s364 = ssub.s32 %s15, 1
      %p365 = scmp.lt.s32.totalorder %s24, 1
      %s366 = scalar_select %p365, %s24, 1
      %s367 = smul.addr %s366, 4
      %s368 = smul.addr %s367, 4
      %s369 = scalar_lea.vmem %s0, %s368
      %p370 = pneg %p53
      %p371 = pneg %p50
      %p372 = pneg %p74
      %p373 = pneg %p71
      %p374 = pneg %p95
      %p375 = pneg %p92
      %p376 = scmp.lt.s32.totalorder %s25, 2
      %s377 = scalar_select %p376, %s25, 2
      %s378 = smul.addr %s377, 4
      %s379 = smul.addr %s378, 4
      %s380 = scalar_lea.vmem %s3, %s379
      %p381 = pneg %p121
      %p382 = pneg %p118
      %p383 = scmp.lt.s32.totalorder %s25, 2
      %s384 = scalar_select %p383, %s25, 2
      %s385 = smul.addr %s384, 4
      %s386 = smul.addr %s385, 8
      %s387 = scalar_lea.vmem %s4, %s386
      %p388 = pneg %p147
      %p389 = pneg %p144
      %p390 = scmp.lt.s32.totalorder %s25, 2
      %s391 = scalar_select %p390, %s25, 2
      %s392 = smul.addr %s391, 4
      %s393 = smul.addr %s392, 4
      %s394 = scalar_lea.vmem %s5, %s393
      %p395 = pneg %p173
      %p396 = pneg %p170
      %p397 = scmp.lt.s32.totalorder %s25, 2
      %s398 = scalar_select %p397, %s25, 2
      %s399 = smul.addr %s398, 4
      %s400 = smul.addr %s399, 8
      %s401 = scalar_lea.vmem %s6, %s400
      %p402 = pneg %p199
      %p403 = pneg %p196
      %p404 = scmp.lt.s32.totalorder %s25, 2
      %s405 = scalar_select %p404, %s25, 2
      %s406 = smul.addr %s405, 4
      %s407 = smul.addr %s406, 4
      %s408 = scalar_lea.vmem %s7, %s407
      %p409 = pneg %p225
      %p410 = pneg %p222
      %p411 = scmp.lt.s32.totalorder %s25, 2
      %s412 = scalar_select %p411, %s25, 2
      %s413 = smul.addr %s412, 4
      %s414 = smul.addr %s413, 8
      %s415 = scalar_lea.vmem %s8, %s414
      %p416 = pneg %p251
      %p417 = pneg %p248
      %p418 = pneg %p277
      %p419 = pneg %p274
      %p420 = scmp.lt.s32.totalorder %s24, 1
      %s421 = scalar_select %p420, %s24, 1
      %s422 = smul.addr %s421, 4
      %s423 = smul.addr %s422, 8
      %s424 = scalar_lea.vmem %s9, %s423
      %p425 = scmp.lt.s32.totalorder %s24, 1
      %s426 = scalar_select %p425, %s24, 1
      %s427 = smul.addr %s426, 4
      %s428 = smul.addr %s427, 4
      %s429 = scalar_lea.vmem %s0, %s428
      %p430 = scmp.lt.s32.totalorder %s25, 2
      %s431 = scalar_select %p430, %s25, 2
      %s432 = smul.addr %s431, 4
      %s433 = smul.addr %s432, 4
      %s434 = scalar_lea.vmem %s3, %s433
      %p435 = scmp.lt.s32.totalorder %s25, 2
      %s436 = scalar_select %p435, %s25, 2
      %s437 = smul.addr %s436, 4
      %s438 = smul.addr %s437, 8
      %s439 = scalar_lea.vmem %s4, %s438
      %p440 = scmp.lt.s32.totalorder %s25, 2
      %s441 = scalar_select %p440, %s25, 2
      %s442 = smul.addr %s441, 4
      %s443 = smul.addr %s442, 4
      %s444 = scalar_lea.vmem %s5, %s443
      %p445 = scmp.lt.s32.totalorder %s25, 2
      %s446 = scalar_select %p445, %s25, 2
      %s447 = smul.addr %s446, 4
      %s448 = smul.addr %s447, 8
      %s449 = scalar_lea.vmem %s6, %s448
      %p450 = scmp.lt.s32.totalorder %s25, 2
      %s451 = scalar_select %p450, %s25, 2
      %s452 = smul.addr %s451, 4
      %s453 = smul.addr %s452, 4
      %s454 = scalar_lea.vmem %s7, %s453
      %p455 = scmp.lt.s32.totalorder %s25, 2
      %s456 = scalar_select %p455, %s25, 2
      %s457 = smul.addr %s456, 4
      %s458 = smul.addr %s457, 8
      %s459 = scalar_lea.vmem %s8, %s458
      %p460 = scmp.lt.s32.totalorder %s24, 1
      %s461 = scalar_select %p460, %s24, 1
      %s462 = smul.addr %s461, 4
      %s463 = smul.addr %s462, 8
      %s464 = scalar_lea.vmem %s9, %s463
      %p466 = scmp.eq.s32.totalorder %s25, 0
      // Predicated region
      $region57: #{tpu_custom_call.1} parent=55 // pred_check
        %p467 = pneg %p466
      $region58: #{tpu_custom_call.1} parent=55 // pred_check_branch
        %469 = sbr.rel (%p467) target = $region60
      $region59: #{tpu_custom_call.1} parent=55 // pred_region
        %vm470 = vcmask 1044352
        %471 = vst.msk [vmem:[#allocation3] sm:$0xf] %vm470, 0
        %472 = vst.msk [vmem:[#allocation3 + $0x8] sm:$0xf] %vm470, 0
        %473 = vst.msk [vmem:[#allocation3 + $0x10] sm:$0xf] %vm470, 0
        %474 = vst.msk [vmem:[#allocation3 + $0x18] sm:$0xf] %vm470, 0
        %vm475 = vcmask 322752
        %476 = vst.msk [vmem:[#allocation3 + $0x4] sm:$0xf] %vm475, 0
        %477 = vst.msk [vmem:[#allocation3 + $0xc] sm:$0xf] %vm475, 0
        %478 = vst.msk [vmem:[#allocation3 + $0x14] sm:$0xf] %vm475, 0
        %479 = vst.msk [vmem:[#allocation3 + $0x1c] sm:$0xf] %vm475, 0
        %480 = vst.msk [vmem:[#allocation5] sm:$0xf] %vm470, 0
        %481 = vst.msk [vmem:[#allocation5 + $0x8] sm:$0xf] %vm470, 0
        %482 = vst.msk [vmem:[#allocation5 + $0x10] sm:$0xf] %vm470, 0
        %483 = vst.msk [vmem:[#allocation5 + $0x18] sm:$0xf] %vm470, 0
        %484 = vst.msk [vmem:[#allocation5 + $0x4] sm:$0xf] %vm475, 0
        %485 = vst.msk [vmem:[#allocation5 + $0xc] sm:$0xf] %vm475, 0
        %486 = vst.msk [vmem:[#allocation5 + $0x14] sm:$0xf] %vm475, 0
        %487 = vst.msk [vmem:[#allocation5 + $0x1c] sm:$0xf] %vm475, 0
        %v488 = vld [vmem:[%s429] sm:$0xf]
        %v489 = vld [vmem:[%s429 + $0x4] sm:$0xf]
        %v490 = vld [vmem:[%s429 + $0x8] sm:$0xf]
        %v491 = vld [vmem:[%s429 + $0xc] sm:$0xf]
        %vm492 = vcmask 191488
        %493 = vst.msk [vmem:[#allocation5 + $0x4] sm:$0xf] %vm492, %v488
        %494 = vst.msk [vmem:[#allocation5 + $0xc] sm:$0xf] %vm492, %v489
        %495 = vst.msk [vmem:[#allocation5 + $0x14] sm:$0xf] %vm492, %v490
        %496 = vst.msk [vmem:[#allocation5 + $0x1c] sm:$0xf] %vm492, %v491
        %v497 = vld [vmem:[#allocation5] sm:$0xff]
        %v498 = vld [vmem:[#allocation5 + $0x8] sm:$0xff]
        %v499 = vld [vmem:[#allocation5 + $0x10] sm:$0xff]
        %v500 = vld [vmem:[#allocation5 + $0x18] sm:$0xff]
        %505 = vrot.lane.b32.xlu0 %v497, 1
        %v506 = vpop.permute.xlu0 %505
        %507 = vrot.lane.b32.xlu0 %v498, 1
        %v508 = vpop.permute.xlu0 %507
        %509 = vrot.lane.b32.xlu0 %v499, 1
        %v510 = vpop.permute.xlu0 %509
        %511 = vrot.lane.b32.xlu0 %v500, 1
        %v512 = vpop.permute.xlu0 %511
        %v513 = vrot.slane %v506, 4
        %v514 = vrot.slane %v508, 4
        %v515 = vrot.slane %v510, 4
        %v516 = vrot.slane %v512, 4
        %vm517 = vcmask 7168
        %v518 = vsel %vm517, %v506, %v513
        %v519 = vsel %vm517, %v508, %v514
        %v520 = vsel %vm517, %v510, %v515
        %v521 = vsel %vm517, %v512, %v516
        %526 = vst.msk [vmem:[#allocation6] sm:$0xf] %vm492, %v518
        %527 = vst.msk [vmem:[#allocation6 + $0x4] sm:$0xf] %vm492, %v519
        %528 = vst.msk [vmem:[#allocation6 + $0x8] sm:$0xf] %vm492, %v520
        %529 = vst.msk [vmem:[#allocation6 + $0xc] sm:$0xf] %vm492, %v521
        %v530 = vld [vmem:[#allocation5 + $0x4] sm:$0xf]
        %v531 = vld [vmem:[#allocation5 + $0xc] sm:$0xf]
        %v532 = vld [vmem:[#allocation5 + $0x14] sm:$0xf]
        %v533 = vld [vmem:[#allocation5 + $0x1c] sm:$0xf]
        %534 = vst.msk [vmem:[#allocation6 + $0x10] sm:$0xf] %vm492, %v530
        %535 = vst.msk [vmem:[#allocation6 + $0x14] sm:$0xf] %vm492, %v531
        %536 = vst.msk [vmem:[#allocation6 + $0x18] sm:$0xf] %vm492, %v532
        %537 = vst.msk [vmem:[#allocation6 + $0x1c] sm:$0xf] %vm492, %v533
        %v538 = vld [vmem:[#allocation5 + $0x4] sm:$0xf]
        %v539 = vld [vmem:[#allocation5 + $0xc] sm:$0xf]
        %v540 = vld [vmem:[#allocation5 + $0x14] sm:$0xf]
        %v541 = vld [vmem:[#allocation5 + $0x1c] sm:$0xf]
        %546 = vrot.lane.b32.xlu0 %v538, 127
        %v547 = vpop.permute.xlu0 %546
        %548 = vrot.lane.b32.xlu0 %v539, 127
        %v549 = vpop.permute.xlu0 %548
        %550 = vrot.lane.b32.xlu0 %v540, 127
        %v551 = vpop.permute.xlu0 %550
        %552 = vrot.lane.b32.xlu0 %v541, 127
        %v553 = vpop.permute.xlu0 %552
        %558 = vst.msk [vmem:[#allocation6 + $0x20] sm:$0xf] %vm492, %v547
        %559 = vst.msk [vmem:[#allocation6 + $0x24] sm:$0xf] %vm492, %v549
        %560 = vst.msk [vmem:[#allocation6 + $0x28] sm:$0xf] %vm492, %v551
        %561 = vst.msk [vmem:[#allocation6 + $0x2c] sm:$0xf] %vm492, %v553
        %v562 = vld [vmem:[%s1] sm:$0xf]
        %v563 = vld [vmem:[%s1 + $0x4] sm:$0xf]
        %v564 = vld [vmem:[%s1 + $0x8] sm:$0xf]
        %v565 = vld [vmem:[%s1 + $0xc] sm:$0xf]
        %v566 = vld [vmem:[#allocation6] sm:$0xf]
        %v567 = vld [vmem:[#allocation6 + $0x4] sm:$0xf]
        %v568 = vld [vmem:[#allocation6 + $0x8] sm:$0xf]
        %v569 = vld [vmem:[#allocation6 + $0xc] sm:$0xf]
        %v570 = vld [vmem:[#allocation6 + $0x10] sm:$0xf]
        %v571 = vld [vmem:[#allocation6 + $0x14] sm:$0xf]
        %v572 = vld [vmem:[#allocation6 + $0x18] sm:$0xf]
        %v573 = vld [vmem:[#allocation6 + $0x1c] sm:$0xf]
        %v574 = vld [vmem:[#allocation6 + $0x20] sm:$0xf]
        %v575 = vld [vmem:[#allocation6 + $0x24] sm:$0xf]
        %v576 = vld [vmem:[#allocation6 + $0x28] sm:$0xf]
        %v577 = vld [vmem:[#allocation6 + $0x2c] sm:$0xf]
        %v578 = vld [vmem:[%s2] sm:$0xff]
        %v579 = vld [vmem:[%s2 + $0x8] sm:$0xff]
        %v580 = vld [vmem:[%s2 + $0x10] sm:$0xff]
        %v581 = vld [vmem:[%s2 + $0x18] sm:$0xff]
        %583 = vset.pattern.permute.xlu0 0
        %584 = vperm.xlu0 %583, %v578
        %v585 = vpop.permute.xlu0 %584
        %588 = vset.pattern.permute.xlu0 0
        %589 = vperm.xlu0 %588, %v579
        %v590 = vpop.permute.xlu0 %589
        %593 = vset.pattern.permute.xlu0 0
        %594 = vperm.xlu0 %593, %v580
        %v595 = vpop.permute.xlu0 %594
        %598 = vset.pattern.permute.xlu0 0
        %599 = vperm.xlu0 %598, %v581
        %v600 = vpop.permute.xlu0 %599
        %v606 = vunpack.c.l.b16 %v562
        %v607 = vunpack.c.l.b16 %v563
        %v608 = vunpack.c.l.b16 %v564
        %v609 = vunpack.c.l.b16 %v565
        %v610 = vpack.c.b16 %v607, %v606
        %v611 = vpack.c.b16 %v609, %v608
        %v624 = vunpack.c.l.b16 %v566
        %v625 = vunpack.c.l.b16 %v567
        %v626 = vunpack.c.l.b16 %v568
        %v627 = vunpack.c.l.b16 %v569
        %v628 = vunpack.c.l.b16 %v570
        %v629 = vunpack.c.l.b16 %v571
        %v630 = vunpack.c.l.b16 %v572
        %v631 = vunpack.c.l.b16 %v573
        %v632 = vunpack.c.l.b16 %v574
        %v633 = vunpack.c.l.b16 %v575
        %v634 = vunpack.c.l.b16 %v576
        %v635 = vunpack.c.l.b16 %v577
        %v636 = vpack.c.b16 %v625, %v624
        %v637 = vpack.c.b16 %v627, %v626
        %v638 = vpack.c.b16 %v629, %v628
        %v639 = vpack.c.b16 %v631, %v630
        %v640 = vpack.c.b16 %v633, %v632
        %v641 = vpack.c.b16 %v635, %v634
        %vm648 = vcmask 785408
        %v650 = vsel %vm648, %v610, 0
        %v653 = vsel %vm648, %v611, 0
        %655 = vmatprep.subr.bf16.mxu0 0
        %656 = vmatpush1.bf16.msra.mxu0 0
        %657 = vmatprep.subr.bf16.mxu0 0
        %658 = vmatpush1.bf16.msra.mxu0 0
        %659 = vmatprep.subr.bf16.mxu0 0
        %660 = vmatpush1.bf16.msra.mxu0 %v641
        %661 = vmatprep.subr.bf16.mxu0 0
        %662 = vmatpush1.bf16.msra.mxu0 %v640
        %663 = vmatprep.subr.bf16.mxu0 0
        %664 = vmatpush1.bf16.msra.mxu0 %v639
        %665 = vmatprep.subr.bf16.mxu0 0
        %666 = vmatpush1.bf16.msra.mxu0 %v638
        %667 = vmatprep.subr.bf16.mxu0 0
        %668 = vmatpush1.bf16.msra.mxu0 %v637
        %669 = vmatprep.subr.bf16.mxu0 0
        %670 = vmatpush1.bf16.msra.mxu0 %v636
        %671 = vmatprep.subr.bf16.mxu0 0
        %672 = vmatpush2.bf16.msra.mxu0 0
        %673 = vmatprep.subr.bf16.mxu0 0
        %674 = vmatpush2.bf16.msra.mxu0 0
        %675 = vmatprep.subr.bf16.mxu0 0
        %676 = vmatpush2.bf16.msra.mxu0 0
        %677 = vmatprep.subr.bf16.mxu0 0
        %678 = vmatpush2.bf16.msra.mxu0 0
        %679 = vmatprep.subr.bf16.mxu0 0
        %680 = vmatpush2.bf16.msra.mxu0 0
        %681 = vmatprep.subr.bf16.mxu0 0
        %682 = vmatpush2.bf16.msra.mxu0 0
        %683 = vmatprep.subr.bf16.mxu0 0
        %684 = vmatpush2.bf16.msra.mxu0 0
        %685 = vmatprep.subr.bf16.mxu0 0
        %686 = vmatpush2.bf16.msra.mxu0 0
        %687 = vmatprep.mubr.bf16.mxu0 0
        %688 = vmatmul.mubr.bf16.gmra.mxu0 %v650
        %v689 = vpop.f32.mrf.mxu0
        %v690 = vadd.f32 %v585, %v689
        %v691 = vpop.f32.mrf.mxu0
        %v692 = vpop.f32.mrf.mxu0
        %v693 = vadd.f32 %v590, %v692
        %v694 = vpop.f32.mrf.mxu0
        %695 = vmatprep.mubr.bf16.mxu0 0
        %696 = vmatmul.mubr.bf16.gmra.mxu0 %v653
        %v697 = vpop.f32.mrf.mxu0
        %v698 = vadd.f32 %v595, %v697
        %v699 = vpop.f32.mrf.mxu0
        %v700 = vpop.f32.mrf.mxu0
        %v701 = vadd.f32 %v600, %v700
        %v702 = vpop.f32.mrf.mxu0
        %703 = vdwg.mxu0
        %vm704 = vcmask 195584
        %v705 = vsel %vm704, %v690, 0.0
        %706 = vadd.xlane.f32.xlu0 %v705
        %v707 = vpop.xlane.xlu0 %706
        %v708 = vsel %vm704, %v693, 0.0
        %709 = vadd.xlane.f32.xlu0 %v708
        %v710 = vpop.xlane.xlu0 %709
        %v711 = vsel %vm704, %v698, 0.0
        %712 = vadd.xlane.f32.xlu0 %v711
        %v713 = vpop.xlane.xlu0 %712
        %v714 = vsel %vm704, %v701, 0.0
        %715 = vadd.xlane.f32.xlu0 %v714
        %v716 = vpop.xlane.xlu0 %715
        %v717 = vrcp.pop 24.0
        %v718 = vmul.f32 %v707, %v717
        %v719 = vmul.f32 %v710, %v717
        %v720 = vmul.f32 %v713, %v717
        %v721 = vmul.f32 %v716, %v717
        %v722 = vsub.f32 %v690, %v718
        %v723 = vsub.f32 %v693, %v719
        %v724 = vsub.f32 %v698, %v720
        %v725 = vsub.f32 %v701, %v721
        %v726 = vmul.f32 %v722, %v722
        %v727 = vmul.f32 %v723, %v723
        %v728 = vmul.f32 %v724, %v724
        %v729 = vmul.f32 %v725, %v725
        %v730 = vsel %vm704, %v726, 0.0
        %731 = vadd.xlane.f32.xlu0 %v730
        %v732 = vpop.xlane.xlu0 %731
        %v733 = vsel %vm704, %v727, 0.0
        %734 = vadd.xlane.f32.xlu0 %v733
        %v735 = vpop.xlane.xlu0 %734
        %v736 = vsel %vm704, %v728, 0.0
        %737 = vadd.xlane.f32.xlu0 %v736
        %v738 = vpop.xlane.xlu0 %737
        %v739 = vsel %vm704, %v729, 0.0
        %740 = vadd.xlane.f32.xlu0 %v739
        %v741 = vpop.xlane.xlu0 %740
        %v742 = vmul.f32 %v732, %v717
        %v743 = vmul.f32 %v735, %v717
        %v744 = vmul.f32 %v738, %v717
        %v745 = vmul.f32 %v741, %v717
        %v746 = vadd.f32 %v742, 1e-05
        %v747 = vadd.f32 %v743, 1e-05
        %v748 = vadd.f32 %v744, 1e-05
        %v749 = vadd.f32 %v745, 1e-05
        %v750 = vrsqrt.pop %v746
        %v751 = vrsqrt.pop %v747
        %v752 = vrsqrt.pop %v748
        %v753 = vrsqrt.pop %v749
        %v754 = vmul.f32 %v722, %v750
        %v755 = vmul.f32 %v723, %v751
        %v756 = vmul.f32 %v724, %v752
        %v757 = vmul.f32 %v725, %v753
        %758 = vst.msk [vmem:[#allocation2] sm:$0xff] %vm704, %v754
        %759 = vst.msk [vmem:[#allocation2 + $0x8] sm:$0xff] %vm704, %v755
        %760 = vst.msk [vmem:[#allocation2 + $0x10] sm:$0xff] %vm704, %v756
        %761 = vst.msk [vmem:[#allocation2 + $0x18] sm:$0xff] %vm704, %v757
      $region60: #{tpu_custom_call.1} parent=55 // pred_fallthru
        _
      %v762 = vld [vmem:[#allocation2] sm:$0xff]
      %v763 = vld [vmem:[#allocation2 + $0x8] sm:$0xff]
      %v764 = vld [vmem:[#allocation2 + $0x10] sm:$0xff]
      %v765 = vld [vmem:[#allocation2 + $0x18] sm:$0xff]
      %v766 = vmax.f32 %v762, 0.0
      %v767 = vmax.f32 %v763, 0.0
      %v768 = vmax.f32 %v764, 0.0
      %v769 = vmax.f32 %v765, 0.0
      %v770 = vpack.c.bf16 %v767, %v766
      %v771 = vpack.c.bf16 %v769, %v768
      %v774 = vunpack.c.l.b16 %v770
      %v775 = vunpack.c.h.b16 %v770
      %v776 = vunpack.c.l.b16 %v771
      %v777 = vunpack.c.h.b16 %v771
      %v778 = vpack.c.b16 %v774, %v774
      %v779 = vpack.c.b16 %v775, %v775
      %v780 = vpack.c.b16 %v776, %v776
      %v781 = vpack.c.b16 %v777, %v777
      %vm786 = vcmask 191488
      %787 = vst.msk [vmem:[#allocation3 + $0x4] sm:$0xf] %vm786, %v778
      %788 = vst.msk [vmem:[#allocation3 + $0xc] sm:$0xf] %vm786, %v779
      %789 = vst.msk [vmem:[#allocation3 + $0x14] sm:$0xf] %vm786, %v780
      %790 = vst.msk [vmem:[#allocation3 + $0x1c] sm:$0xf] %vm786, %v781
      %v791 = vld [vmem:[#allocation3] sm:$0xff]
      %v792 = vld [vmem:[#allocation3 + $0x8] sm:$0xff]
      %v793 = vld [vmem:[#allocation3 + $0x10] sm:$0xff]
      %v794 = vld [vmem:[#allocation3 + $0x18] sm:$0xff]
      %799 = vrot.lane.b32.xlu0 %v791, 1
      %v800 = vpop.permute.xlu0 %799
      %801 = vrot.lane.b32.xlu0 %v792, 1
      %v802 = vpop.permute.xlu0 %801
      %803 = vrot.lane.b32.xlu0 %v793, 1
      %v804 = vpop.permute.xlu0 %803
      %805 = vrot.lane.b32.xlu0 %v794, 1
      %v806 = vpop.permute.xlu0 %805
      %v807 = vrot.slane %v800, 4
      %v808 = vrot.slane %v802, 4
      %v809 = vrot.slane %v804, 4
      %v810 = vrot.slane %v806, 4
      %vm811 = vcmask 7168
      %v812 = vsel %vm811, %v800, %v807
      %v813 = vsel %vm811, %v802, %v808
      %v814 = vsel %vm811, %v804, %v809
      %v815 = vsel %vm811, %v806, %v810
      %820 = vst.msk [vmem:[#allocation4] sm:$0xf] %vm786, %v812
      %821 = vst.msk [vmem:[#allocation4 + $0x4] sm:$0xf] %vm786, %v813
      %822 = vst.msk [vmem:[#allocation4 + $0x8] sm:$0xf] %vm786, %v814
      %823 = vst.msk [vmem:[#allocation4 + $0xc] sm:$0xf] %vm786, %v815
      %v824 = vld [vmem:[#allocation3 + $0x4] sm:$0xf]
      %v825 = vld [vmem:[#allocation3 + $0xc] sm:$0xf]
      %v826 = vld [vmem:[#allocation3 + $0x14] sm:$0xf]
      %v827 = vld [vmem:[#allocation3 + $0x1c] sm:$0xf]
      %828 = vst.msk [vmem:[#allocation4 + $0x10] sm:$0xf] %vm786, %v824
      %829 = vst.msk [vmem:[#allocation4 + $0x14] sm:$0xf] %vm786, %v825
      %830 = vst.msk [vmem:[#allocation4 + $0x18] sm:$0xf] %vm786, %v826
      %831 = vst.msk [vmem:[#allocation4 + $0x1c] sm:$0xf] %vm786, %v827
      %v832 = vld [vmem:[#allocation3 + $0x4] sm:$0xf]
      %v833 = vld [vmem:[#allocation3 + $0xc] sm:$0xf]
      %v834 = vld [vmem:[#allocation3 + $0x14] sm:$0xf]
      %v835 = vld [vmem:[#allocation3 + $0x1c] sm:$0xf]
      %840 = vrot.lane.b32.xlu0 %v832, 127
      %v841 = vpop.permute.xlu0 %840
      %842 = vrot.lane.b32.xlu0 %v833, 127
      %v843 = vpop.permute.xlu0 %842
      %844 = vrot.lane.b32.xlu0 %v834, 127
      %v845 = vpop.permute.xlu0 %844
      %846 = vrot.lane.b32.xlu0 %v835, 127
      %v847 = vpop.permute.xlu0 %846
      %852 = vst.msk [vmem:[#allocation4 + $0x20] sm:$0xf] %vm786, %v841
      %853 = vst.msk [vmem:[#allocation4 + $0x24] sm:$0xf] %vm786, %v843
      %854 = vst.msk [vmem:[#allocation4 + $0x28] sm:$0xf] %vm786, %v845
      %855 = vst.msk [vmem:[#allocation4 + $0x2c] sm:$0xf] %vm786, %v847
      %v856 = vld [vmem:[%s434] sm:$0xf]
      %v857 = vld [vmem:[%s434 + $0x4] sm:$0xf]
      %v858 = vld [vmem:[%s434 + $0x8] sm:$0xf]
      %v859 = vld [vmem:[%s434 + $0xc] sm:$0xf]
      %v860 = vld [vmem:[#allocation4] sm:$0xf]
      %v861 = vld [vmem:[#allocation4 + $0x4] sm:$0xf]
      %v862 = vld [vmem:[#allocation4 + $0x8] sm:$0xf]
      %v863 = vld [vmem:[#allocation4 + $0xc] sm:$0xf]
      %v864 = vld [vmem:[#allocation4 + $0x10] sm:$0xf]
      %v865 = vld [vmem:[#allocation4 + $0x14] sm:$0xf]
      %v866 = vld [vmem:[#allocation4 + $0x18] sm:$0xf]
      %v867 = vld [vmem:[#allocation4 + $0x1c] sm:$0xf]
      %v868 = vld [vmem:[#allocation4 + $0x20] sm:$0xf]
      %v869 = vld [vmem:[#allocation4 + $0x24] sm:$0xf]
      %v870 = vld [vmem:[#allocation4 + $0x28] sm:$0xf]
      %v871 = vld [vmem:[#allocation4 + $0x2c] sm:$0xf]
      %v872 = vld [vmem:[%s439] sm:$0xff]
      %v873 = vld [vmem:[%s439 + $0x8] sm:$0xff]
      %v874 = vld [vmem:[%s439 + $0x10] sm:$0xff]
      %v875 = vld [vmem:[%s439 + $0x18] sm:$0xff]
      %877 = vset.pattern.permute.xlu0 0
      %878 = vperm.xlu0 %877, %v872
      %v879 = vpop.permute.xlu0 %878
      %882 = vset.pattern.permute.xlu0 0
      %883 = vperm.xlu0 %882, %v873
      %v884 = vpop.permute.xlu0 %883
      %887 = vset.pattern.permute.xlu0 0
      %888 = vperm.xlu0 %887, %v874
      %v889 = vpop.permute.xlu0 %888
      %892 = vset.pattern.permute.xlu0 0
      %893 = vperm.xlu0 %892, %v875
      %v894 = vpop.permute.xlu0 %893
      %v900 = vunpack.c.l.b16 %v856
      %v901 = vunpack.c.l.b16 %v857
      %v902 = vunpack.c.l.b16 %v858
      %v903 = vunpack.c.l.b16 %v859
      %v904 = vpack.c.b16 %v901, %v900
      %v905 = vpack.c.b16 %v903, %v902
      %v918 = vunpack.c.l.b16 %v860
      %v919 = vunpack.c.l.b16 %v861
      %v920 = vunpack.c.l.b16 %v862
      %v921 = vunpack.c.l.b16 %v863
      %v922 = vunpack.c.l.b16 %v864
      %v923 = vunpack.c.l.b16 %v865
      %v924 = vunpack.c.l.b16 %v866
      %v925 = vunpack.c.l.b16 %v867
      %v926 = vunpack.c.l.b16 %v868
      %v927 = vunpack.c.l.b16 %v869
      %v928 = vunpack.c.l.b16 %v870
      %v929 = vunpack.c.l.b16 %v871
      %v930 = vpack.c.b16 %v919, %v918
      %v931 = vpack.c.b16 %v921, %v920
      %v932 = vpack.c.b16 %v923, %v922
      %v933 = vpack.c.b16 %v925, %v924
      %v934 = vpack.c.b16 %v927, %v926
      %v935 = vpack.c.b16 %v929, %v928
      %vm942 = vcmask 785408
      %v944 = vsel %vm942, %v904, 0
      %v947 = vsel %vm942, %v905, 0
      %949 = vmatprep.subr.bf16.mxu0 0
      %950 = vmatpush1.bf16.msra.mxu0 0
      %951 = vmatprep.subr.bf16.mxu0 0
      %952 = vmatpush1.bf16.msra.mxu0 0
      %953 = vmatprep.subr.bf16.mxu0 0
      %954 = vmatpush1.bf16.msra.mxu0 %v935
      %955 = vmatprep.subr.bf16.mxu0 0
      %956 = vmatpush1.bf16.msra.mxu0 %v934
      %957 = vmatprep.subr.bf16.mxu0 0
      %958 = vmatpush1.bf16.msra.mxu0 %v933
      %959 = vmatprep.subr.bf16.mxu0 0
      %960 = vmatpush1.bf16.msra.mxu0 %v932
      %961 = vmatprep.subr.bf16.mxu0 0
      %962 = vmatpush1.bf16.msra.mxu0 %v931
      %963 = vmatprep.subr.bf16.mxu0 0
      %964 = vmatpush1.bf16.msra.mxu0 %v930
      %965 = vmatprep.subr.bf16.mxu0 0
      %966 = vmatpush2.bf16.msra.mxu0 0
      %967 = vmatprep.subr.bf16.mxu0 0
      %968 = vmatpush2.bf16.msra.mxu0 0
      %969 = vmatprep.subr.bf16.mxu0 0
      %970 = vmatpush2.bf16.msra.mxu0 0
      %971 = vmatprep.subr.bf16.mxu0 0
      %972 = vmatpush2.bf16.msra.mxu0 0
      %973 = vmatprep.subr.bf16.mxu0 0
      %974 = vmatpush2.bf16.msra.mxu0 0
      %975 = vmatprep.subr.bf16.mxu0 0
      %976 = vmatpush2.bf16.msra.mxu0 0
      %977 = vmatprep.subr.bf16.mxu0 0
      %978 = vmatpush2.bf16.msra.mxu0 0
      %979 = vmatprep.subr.bf16.mxu0 0
      %980 = vmatpush2.bf16.msra.mxu0 0
      %981 = vmatprep.mubr.bf16.mxu0 0
      %982 = vmatmul.mubr.bf16.gmra.mxu0 %v944
      %v983 = vpop.f32.mrf.mxu0
      %v984 = vadd.f32 %v879, %v983
      %v985 = vpop.f32.mrf.mxu0
      %v986 = vpop.f32.mrf.mxu0
      %v987 = vadd.f32 %v884, %v986
      %v988 = vpop.f32.mrf.mxu0
      %989 = vmatprep.mubr.bf16.mxu0 0
      %990 = vmatmul.mubr.bf16.gmra.mxu0 %v947
      %v991 = vpop.f32.mrf.mxu0
      %v992 = vadd.f32 %v889, %v991
      %v993 = vpop.f32.mrf.mxu0
      %v994 = vpop.f32.mrf.mxu0
      %v995 = vadd.f32 %v894, %v994
      %v996 = vpop.f32.mrf.mxu0
      %997 = vdwg.mxu0
      %v998 = vmax.f32 %v984, 0.0
      %v999 = vmax.f32 %v987, 0.0
      %v1000 = vmax.f32 %v992, 0.0
      %v1001 = vmax.f32 %v995, 0.0
      %v1002 = vpack.c.bf16 %v999, %v998
      %v1003 = vpack.c.bf16 %v1001, %v1000
      %v1006 = vunpack.c.l.b16 %v1002
      %v1007 = vunpack.c.h.b16 %v1002
      %v1008 = vunpack.c.l.b16 %v1003
      %v1009 = vunpack.c.h.b16 %v1003
      %v1010 = vpack.c.b16 %v1006, %v1006
      %v1011 = vpack.c.b16 %v1007, %v1007
      %v1012 = vpack.c.b16 %v1008, %v1008
      %v1013 = vpack.c.b16 %v1009, %v1009
      %1018 = vst.msk [vmem:[#allocation3 + $0x4] sm:$0xf] %vm786, %v1010
      %1019 = vst.msk [vmem:[#allocation3 + $0xc] sm:$0xf] %vm786, %v1011
      %1020 = vst.msk [vmem:[#allocation3 + $0x14] sm:$0xf] %vm786, %v1012
      %1021 = vst.msk [vmem:[#allocation3 + $0x1c] sm:$0xf] %vm786, %v1013
      %v1022 = vld [vmem:[#allocation3] sm:$0xff]
      %v1023 = vld [vmem:[#allocation3 + $0x8] sm:$0xff]
      %v1024 = vld [vmem:[#allocation3 + $0x10] sm:$0xff]
      %v1025 = vld [vmem:[#allocation3 + $0x18] sm:$0xff]
      %1030 = vrot.lane.b32.xlu0 %v1022, 3
      %v1031 = vpop.permute.xlu0 %1030
      %1032 = vrot.lane.b32.xlu0 %v1023, 3
      %v1033 = vpop.permute.xlu0 %1032
      %1034 = vrot.lane.b32.xlu0 %v1024, 3
      %v1035 = vpop.permute.xlu0 %1034
      %1036 = vrot.lane.b32.xlu0 %v1025, 3
      %v1037 = vpop.permute.xlu0 %1036
      %v1038 = vrot.slane %v1031, 4
      %v1039 = vrot.slane %v1033, 4
      %v1040 = vrot.slane %v1035, 4
      %v1041 = vrot.slane %v1037, 4
      %vm1042 = vcmask 23552
      %v1043 = vsel %vm1042, %v1031, %v1038
      %v1044 = vsel %vm1042, %v1033, %v1039
      %v1045 = vsel %vm1042, %v1035, %v1040
      %v1046 = vsel %vm1042, %v1037, %v1041
      %1051 = vst.msk [vmem:[#allocation4] sm:$0xf] %vm786, %v1043
      %1052 = vst.msk [vmem:[#allocation4 + $0x4] sm:$0xf] %vm786, %v1044
      %1053 = vst.msk [vmem:[#allocation4 + $0x8] sm:$0xf] %vm786, %v1045
      %1054 = vst.msk [vmem:[#allocation4 + $0xc] sm:$0xf] %vm786, %v1046
      %v1055 = vld [vmem:[#allocation3 + $0x4] sm:$0xf]
      %v1056 = vld [vmem:[#allocation3 + $0xc] sm:$0xf]
      %v1057 = vld [vmem:[#allocation3 + $0x14] sm:$0xf]
      %v1058 = vld [vmem:[#allocation3 + $0x1c] sm:$0xf]
      %1059 = vst.msk [vmem:[#allocation4 + $0x10] sm:$0xf] %vm786, %v1055
      %1060 = vst.msk [vmem:[#allocation4 + $0x14] sm:$0xf] %vm786, %v1056
      %1061 = vst.msk [vmem:[#allocation4 + $0x18] sm:$0xf] %vm786, %v1057
      %1062 = vst.msk [vmem:[#allocation4 + $0x1c] sm:$0xf] %vm786, %v1058
      %v1063 = vld [vmem:[#allocation3 + $0x4] sm:$0xf]
      %v1064 = vld [vmem:[#allocation3 + $0xc] sm:$0xf]
      %v1065 = vld [vmem:[#allocation3 + $0x14] sm:$0xf]
      %v1066 = vld [vmem:[#allocation3 + $0x1c] sm:$0xf]
      %1071 = vrot.lane.b32.xlu0 %v1063, 125
      %v1072 = vpop.permute.xlu0 %1071
      %1073 = vrot.lane.b32.xlu0 %v1064, 125
      %v1074 = vpop.permute.xlu0 %1073
      %1075 = vrot.lane.b32.xlu0 %v1065, 125
      %v1076 = vpop.permute.xlu0 %1075
      %1077 = vrot.lane.b32.xlu0 %v1066, 125
      %v1078 = vpop.permute.xlu0 %1077
      %1083 = vst.msk [vmem:[#allocation4 + $0x20] sm:$0xf] %vm786, %v1072
      %1084 = vst.msk [vmem:[#allocation4 + $0x24] sm:$0xf] %vm786, %v1074
      %1085 = vst.msk [vmem:[#allocation4 + $0x28] sm:$0xf] %vm786, %v1076
      %1086 = vst.msk [vmem:[#allocation4 + $0x2c] sm:$0xf] %vm786, %v1078
      %v1087 = vld [vmem:[%s444] sm:$0xf]
      %v1088 = vld [vmem:[%s444 + $0x4] sm:$0xf]
      %v1089 = vld [vmem:[%s444 + $0x8] sm:$0xf]
      %v1090 = vld [vmem:[%s444 + $0xc] sm:$0xf]
      %v1091 = vld [vmem:[#allocation4] sm:$0xf]
      %v1092 = vld [vmem:[#allocation4 + $0x4] sm:$0xf]
      %v1093 = vld [vmem:[#allocation4 + $0x8] sm:$0xf]
      %v1094 = vld [vmem:[#allocation4 + $0xc] sm:$0xf]
      %v1095 = vld [vmem:[#allocation4 + $0x10] sm:$0xf]
      %v1096 = vld [vmem:[#allocation4 + $0x14] sm:$0xf]
      %v1097 = vld [vmem:[#allocation4 + $0x18] sm:$0xf]
      %v1098 = vld [vmem:[#allocation4 + $0x1c] sm:$0xf]
      %v1099 = vld [vmem:[#allocation4 + $0x20] sm:$0xf]
      %v1100 = vld [vmem:[#allocation4 + $0x24] sm:$0xf]
      %v1101 = vld [vmem:[#allocation4 + $0x28] sm:$0xf]
      %v1102 = vld [vmem:[#allocation4 + $0x2c] sm:$0xf]
      %v1103 = vld [vmem:[%s449] sm:$0xff]
      %v1104 = vld [vmem:[%s449 + $0x8] sm:$0xff]
      %v1105 = vld [vmem:[%s449 + $0x10] sm:$0xff]
      %v1106 = vld [vmem:[%s449 + $0x18] sm:$0xff]
      %1108 = vset.pattern.permute.xlu0 0
      %1109 = vperm.xlu0 %1108, %v1103
      %v1110 = vpop.permute.xlu0 %1109
      %1113 = vset.pattern.permute.xlu0 0
      %1114 = vperm.xlu0 %1113, %v1104
      %v1115 = vpop.permute.xlu0 %1114
      %1118 = vset.pattern.permute.xlu0 0
      %1119 = vperm.xlu0 %1118, %v1105
      %v1120 = vpop.permute.xlu0 %1119
      %1123 = vset.pattern.permute.xlu0 0
      %1124 = vperm.xlu0 %1123, %v1106
      %v1125 = vpop.permute.xlu0 %1124
      %v1131 = vunpack.c.l.b16 %v1087
      %v1132 = vunpack.c.l.b16 %v1088
      %v1133 = vunpack.c.l.b16 %v1089
      %v1134 = vunpack.c.l.b16 %v1090
      %v1135 = vpack.c.b16 %v1132, %v1131
      %v1136 = vpack.c.b16 %v1134, %v1133
      %v1149 = vunpack.c.l.b16 %v1091
      %v1150 = vunpack.c.l.b16 %v1092
      %v1151 = vunpack.c.l.b16 %v1093
      %v1152 = vunpack.c.l.b16 %v1094
      %v1153 = vunpack.c.l.b16 %v1095
      %v1154 = vunpack.c.l.b16 %v1096
      %v1155 = vunpack.c.l.b16 %v1097
      %v1156 = vunpack.c.l.b16 %v1098
      %v1157 = vunpack.c.l.b16 %v1099
      %v1158 = vunpack.c.l.b16 %v1100
      %v1159 = vunpack.c.l.b16 %v1101
      %v1160 = vunpack.c.l.b16 %v1102
      %v1161 = vpack.c.b16 %v1150, %v1149
      %v1162 = vpack.c.b16 %v1152, %v1151
      %v1163 = vpack.c.b16 %v1154, %v1153
      %v1164 = vpack.c.b16 %v1156, %v1155
      %v1165 = vpack.c.b16 %v1158, %v1157
      %v1166 = vpack.c.b16 %v1160, %v1159
      %v1174 = vsel %vm942, %v1135, 0
      %v1177 = vsel %vm942, %v1136, 0
      %1179 = vmatprep.subr.bf16.mxu0 0
      %1180 = vmatpush1.bf16.msra.mxu0 0
      %1181 = vmatprep.subr.bf16.mxu0 0
      %1182 = vmatpush1.bf16.msra.mxu0 0
      %1183 = vmatprep.subr.bf16.mxu0 0
      %1184 = vmatpush1.bf16.msra.mxu0 %v1166
      %1185 = vmatprep.subr.bf16.mxu0 0
      %1186 = vmatpush1.bf16.msra.mxu0 %v1165
      %1187 = vmatprep.subr.bf16.mxu0 0
      %1188 = vmatpush1.bf16.msra.mxu0 %v1164
      %1189 = vmatprep.subr.bf16.mxu0 0
      %1190 = vmatpush1.bf16.msra.mxu0 %v1163
      %1191 = vmatprep.subr.bf16.mxu0 0
      %1192 = vmatpush1.bf16.msra.mxu0 %v1162
      %1193 = vmatprep.subr.bf16.mxu0 0
      %1194 = vmatpush1.bf16.msra.mxu0 %v1161
      %1195 = vmatprep.subr.bf16.mxu0 0
      %1196 = vmatpush2.bf16.msra.mxu0 0
      %1197 = vmatprep.subr.bf16.mxu0 0
      %1198 = vmatpush2.bf16.msra.mxu0 0
      %1199 = vmatprep.subr.bf16.mxu0 0
      %1200 = vmatpush2.bf16.msra.mxu0 0
      %1201 = vmatprep.subr.bf16.mxu0 0
      %1202 = vmatpush2.bf16.msra.mxu0 0
      %1203 = vmatprep.subr.bf16.mxu0 0
      %1204 = vmatpush2.bf16.msra.mxu0 0
      %1205 = vmatprep.subr.bf16.mxu0 0
      %1206 = vmatpush2.bf16.msra.mxu0 0
      %1207 = vmatprep.subr.bf16.mxu0 0
      %1208 = vmatpush2.bf16.msra.mxu0 0
      %1209 = vmatprep.subr.bf16.mxu0 0
      %1210 = vmatpush2.bf16.msra.mxu0 0
      %1211 = vmatprep.mubr.bf16.mxu0 0
      %1212 = vmatmul.mubr.bf16.gmra.mxu0 %v1174
      %v1213 = vpop.f32.mrf.mxu0
      %v1214 = vadd.f32 %v1110, %v1213
      %v1215 = vpop.f32.mrf.mxu0
      %v1216 = vpop.f32.mrf.mxu0
      %v1217 = vadd.f32 %v1115, %v1216
      %v1218 = vpop.f32.mrf.mxu0
      %1219 = vmatprep.mubr.bf16.mxu0 0
      %1220 = vmatmul.mubr.bf16.gmra.mxu0 %v1177
      %v1221 = vpop.f32.mrf.mxu0
      %v1222 = vadd.f32 %v1120, %v1221
      %v1223 = vpop.f32.mrf.mxu0
      %v1224 = vpop.f32.mrf.mxu0
      %v1225 = vadd.f32 %v1125, %v1224
      %v1226 = vpop.f32.mrf.mxu0
      %1227 = vdwg.mxu0
      %v1228 = vmax.f32 %v1214, 0.0
      %v1229 = vmax.f32 %v1217, 0.0
      %v1230 = vmax.f32 %v1222, 0.0
      %v1231 = vmax.f32 %v1225, 0.0
      %v1232 = vpack.c.bf16 %v1229, %v1228
      %v1233 = vpack.c.bf16 %v1231, %v1230
      %v1236 = vunpack.c.l.b16 %v1232
      %v1237 = vunpack.c.h.b16 %v1232
      %v1238 = vunpack.c.l.b16 %v1233
      %v1239 = vunpack.c.h.b16 %v1233
      %v1240 = vpack.c.b16 %v1236, %v1236
      %v1241 = vpack.c.b16 %v1237, %v1237
      %v1242 = vpack.c.b16 %v1238, %v1238
      %v1243 = vpack.c.b16 %v1239, %v1239
      %1248 = vst.msk [vmem:[#allocation3 + $0x4] sm:$0xf] %vm786, %v1240
      %1249 = vst.msk [vmem:[#allocation3 + $0xc] sm:$0xf] %vm786, %v1241
      %1250 = vst.msk [vmem:[#allocation3 + $0x14] sm:$0xf] %vm786, %v1242
      %1251 = vst.msk [vmem:[#allocation3 + $0x1c] sm:$0xf] %vm786, %v1243
      %v1252 = vld [vmem:[#allocation3] sm:$0xff]
      %v1253 = vld [vmem:[#allocation3 + $0x8] sm:$0xff]
      %v1254 = vld [vmem:[#allocation3 + $0x10] sm:$0xff]
      %v1255 = vld [vmem:[#allocation3 + $0x18] sm:$0xff]
      %1260 = vrot.lane.b32.xlu0 %v1252, 9
      %v1261 = vpop.permute.xlu0 %1260
      %1262 = vrot.lane.b32.xlu0 %v1253, 9
      %v1263 = vpop.permute.xlu0 %1262
      %1264 = vrot.lane.b32.xlu0 %v1254, 9
      %v1265 = vpop.permute.xlu0 %1264
      %1266 = vrot.lane.b32.xlu0 %v1255, 9
      %v1267 = vpop.permute.xlu0 %1266
      %v1268 = vrot.slane %v1261, 4
      %v1269 = vrot.slane %v1263, 4
      %v1270 = vrot.slane %v1265, 4
      %v1271 = vrot.slane %v1267, 4
      %vm1272 = vcmask 72704
      %v1273 = vsel %vm1272, %v1261, %v1268
      %v1274 = vsel %vm1272, %v1263, %v1269
      %v1275 = vsel %vm1272, %v1265, %v1270
      %v1276 = vsel %vm1272, %v1267, %v1271
      %1281 = vst.msk [vmem:[#allocation4] sm:$0xf] %vm786, %v1273
      %1282 = vst.msk [vmem:[#allocation4 + $0x4] sm:$0xf] %vm786, %v1274
      %1283 = vst.msk [vmem:[#allocation4 + $0x8] sm:$0xf] %vm786, %v1275
      %1284 = vst.msk [vmem:[#allocation4 + $0xc] sm:$0xf] %vm786, %v1276
      %v1285 = vld [vmem:[#allocation3 + $0x4] sm:$0xf]
      %v1286 = vld [vmem:[#allocation3 + $0xc] sm:$0xf]
      %v1287 = vld [vmem:[#allocation3 + $0x14] sm:$0xf]
      %v1288 = vld [vmem:[#allocation3 + $0x1c] sm:$0xf]
      %1289 = vst.msk [vmem:[#allocation4 + $0x10] sm:$0xf] %vm786, %v1285
      %1290 = vst.msk [vmem:[#allocation4 + $0x14] sm:$0xf] %vm786, %v1286
      %1291 = vst.msk [vmem:[#allocation4 + $0x18] sm:$0xf] %vm786, %v1287
      %1292 = vst.msk [vmem:[#allocation4 + $0x1c] sm:$0xf] %vm786, %v1288
      %v1293 = vld [vmem:[#allocation3 + $0x4] sm:$0xf]
      %v1294 = vld [vmem:[#allocation3 + $0xc] sm:$0xf]
      %v1295 = vld [vmem:[#allocation3 + $0x14] sm:$0xf]
      %v1296 = vld [vmem:[#allocation3 + $0x1c] sm:$0xf]
      %1301 = vrot.lane.b32.xlu0 %v1293, 119
      %v1302 = vpop.permute.xlu0 %1301
      %1303 = vrot.lane.b32.xlu0 %v1294, 119
      %v1304 = vpop.permute.xlu0 %1303
      %1305 = vrot.lane.b32.xlu0 %v1295, 119
      %v1306 = vpop.permute.xlu0 %1305
      %1307 = vrot.lane.b32.xlu0 %v1296, 119
      %v1308 = vpop.permute.xlu0 %1307
      %1313 = vst.msk [vmem:[#allocation4 + $0x20] sm:$0xf] %vm786, %v1302
      %1314 = vst.msk [vmem:[#allocation4 + $0x24] sm:$0xf] %vm786, %v1304
      %1315 = vst.msk [vmem:[#allocation4 + $0x28] sm:$0xf] %vm786, %v1306
      %1316 = vst.msk [vmem:[#allocation4 + $0x2c] sm:$0xf] %vm786, %v1308
      %v1317 = vld [vmem:[%s454] sm:$0xf]
      %v1318 = vld [vmem:[%s454 + $0x4] sm:$0xf]
      %v1319 = vld [vmem:[%s454 + $0x8] sm:$0xf]
      %v1320 = vld [vmem:[%s454 + $0xc] sm:$0xf]
      %v1321 = vld [vmem:[#allocation4] sm:$0xf]
      %v1322 = vld [vmem:[#allocation4 + $0x4] sm:$0xf]
      %v1323 = vld [vmem:[#allocation4 + $0x8] sm:$0xf]
      %v1324 = vld [vmem:[#allocation4 + $0xc] sm:$0xf]
      %v1325 = vld [vmem:[#allocation4 + $0x10] sm:$0xf]
      %v1326 = vld [vmem:[#allocation4 + $0x14] sm:$0xf]
      %v1327 = vld [vmem:[#allocation4 + $0x18] sm:$0xf]
      %v1328 = vld [vmem:[#allocation4 + $0x1c] sm:$0xf]
      %v1329 = vld [vmem:[#allocation4 + $0x20] sm:$0xf]
      %v1330 = vld [vmem:[#allocation4 + $0x24] sm:$0xf]
      %v1331 = vld [vmem:[#allocation4 + $0x28] sm:$0xf]
      %v1332 = vld [vmem:[#allocation4 + $0x2c] sm:$0xf]
      %v1333 = vld [vmem:[%s459] sm:$0xff]
      %v1334 = vld [vmem:[%s459 + $0x8] sm:$0xff]
      %v1335 = vld [vmem:[%s459 + $0x10] sm:$0xff]
      %v1336 = vld [vmem:[%s459 + $0x18] sm:$0xff]
      %1338 = vset.pattern.permute.xlu0 0
      %1339 = vperm.xlu0 %1338, %v1333
      %v1340 = vpop.permute.xlu0 %1339
      %1343 = vset.pattern.permute.xlu0 0
      %1344 = vperm.xlu0 %1343, %v1334
      %v1345 = vpop.permute.xlu0 %1344
      %1348 = vset.pattern.permute.xlu0 0
      %1349 = vperm.xlu0 %1348, %v1335
      %v1350 = vpop.permute.xlu0 %1349
      %1353 = vset.pattern.permute.xlu0 0
      %1354 = vperm.xlu0 %1353, %v1336
      %v1355 = vpop.permute.xlu0 %1354
      %v1361 = vunpack.c.l.b16 %v1317
      %v1362 = vunpack.c.l.b16 %v1318
      %v1363 = vunpack.c.l.b16 %v1319
      %v1364 = vunpack.c.l.b16 %v1320
      %v1365 = vpack.c.b16 %v1362, %v1361
      %v1366 = vpack.c.b16 %v1364, %v1363
      %v1379 = vunpack.c.l.b16 %v1321
      %v1380 = vunpack.c.l.b16 %v1322
      %v1381 = vunpack.c.l.b16 %v1323
      %v1382 = vunpack.c.l.b16 %v1324
      %v1383 = vunpack.c.l.b16 %v1325
      %v1384 = vunpack.c.l.b16 %v1326
      %v1385 = vunpack.c.l.b16 %v1327
      %v1386 = vunpack.c.l.b16 %v1328
      %v1387 = vunpack.c.l.b16 %v1329
      %v1388 = vunpack.c.l.b16 %v1330
      %v1389 = vunpack.c.l.b16 %v1331
      %v1390 = vunpack.c.l.b16 %v1332
      %v1391 = vpack.c.b16 %v1380, %v1379
      %v1392 = vpack.c.b16 %v1382, %v1381
      %v1393 = vpack.c.b16 %v1384, %v1383
      %v1394 = vpack.c.b16 %v1386, %v1385
      %v1395 = vpack.c.b16 %v1388, %v1387
      %v1396 = vpack.c.b16 %v1390, %v1389
      %v1404 = vsel %vm942, %v1365, 0
      %v1407 = vsel %vm942, %v1366, 0
      %1409 = vmatprep.subr.bf16.mxu0 0
      %1410 = vmatpush1.bf16.msra.mxu0 0
      %1411 = vmatprep.subr.bf16.mxu0 0
      %1412 = vmatpush1.bf16.msra.mxu0 0
      %1413 = vmatprep.subr.bf16.mxu0 0
      %1414 = vmatpush1.bf16.msra.mxu0 %v1396
      %1415 = vmatprep.subr.bf16.mxu0 0
      %1416 = vmatpush1.bf16.msra.mxu0 %v1395
      %1417 = vmatprep.subr.bf16.mxu0 0
      %1418 = vmatpush1.bf16.msra.mxu0 %v1394
      %1419 = vmatprep.subr.bf16.mxu0 0
      %1420 = vmatpush1.bf16.msra.mxu0 %v1393
      %1421 = vmatprep.subr.bf16.mxu0 0
      %1422 = vmatpush1.bf16.msra.mxu0 %v1392
      %1423 = vmatprep.subr.bf16.mxu0 0
      %1424 = vmatpush1.bf16.msra.mxu0 %v1391
      %1425 = vmatprep.subr.bf16.mxu0 0
      %1426 = vmatpush2.bf16.msra.mxu0 0
      %1427 = vmatprep.subr.bf16.mxu0 0
      %1428 = vmatpush2.bf16.msra.mxu0 0
      %1429 = vmatprep.subr.bf16.mxu0 0
      %1430 = vmatpush2.bf16.msra.mxu0 0
      %1431 = vmatprep.subr.bf16.mxu0 0
      %1432 = vmatpush2.bf16.msra.mxu0 0
      %1433 = vmatprep.subr.bf16.mxu0 0
      %1434 = vmatpush2.bf16.msra.mxu0 0
      %1435 = vmatprep.subr.bf16.mxu0 0
      %1436 = vmatpush2.bf16.msra.mxu0 0
      %1437 = vmatprep.subr.bf16.mxu0 0
      %1438 = vmatpush2.bf16.msra.mxu0 0
      %1439 = vmatprep.subr.bf16.mxu0 0
      %1440 = vmatpush2.bf16.msra.mxu0 0
      %1441 = vmatprep.mubr.bf16.mxu0 0
      %1442 = vmatmul.mubr.bf16.gmra.mxu0 %v1404
      %v1443 = vpop.f32.mrf.mxu0
      %v1444 = vadd.f32 %v1340, %v1443
      %v1445 = vpop.f32.mrf.mxu0
      %v1446 = vpop.f32.mrf.mxu0
      %v1447 = vadd.f32 %v1345, %v1446
      %v1448 = vpop.f32.mrf.mxu0
      %1449 = vmatprep.mubr.bf16.mxu0 0
      %1450 = vmatmul.mubr.bf16.gmra.mxu0 %v1407
      %v1451 = vpop.f32.mrf.mxu0
      %v1452 = vadd.f32 %v1350, %v1451
      %v1453 = vpop.f32.mrf.mxu0
      %v1454 = vpop.f32.mrf.mxu0
      %v1455 = vadd.f32 %v1355, %v1454
      %v1456 = vpop.f32.mrf.mxu0
      %1457 = vdwg.mxu0
      %v1458 = vadd.f32 %v1444, %v762
      %v1459 = vadd.f32 %v1447, %v763
      %v1460 = vadd.f32 %v1452, %v764
      %v1461 = vadd.f32 %v1455, %v765
      %v1462 = vmax.f32 %v1458, 0.0
      %v1463 = vmax.f32 %v1459, 0.0
      %v1464 = vmax.f32 %v1460, 0.0
      %v1465 = vmax.f32 %v1461, 0.0
      %vm1466 = vcmask 195584
      %1467 = vst.msk [vmem:[#allocation2] sm:$0xff] %vm1466, %v1462
      %1468 = vst.msk [vmem:[#allocation2 + $0x8] sm:$0xff] %vm1466, %v1463
      %1469 = vst.msk [vmem:[#allocation2 + $0x10] sm:$0xff] %vm1466, %v1464
      %1470 = vst.msk [vmem:[#allocation2 + $0x18] sm:$0xff] %vm1466, %v1465
      %p1471 = scmp.eq.s32.totalorder %s25, 2
      // Predicated region
      $region61: #{tpu_custom_call.1} parent=55 // pred_check
        %p1472 = pneg %p1471
      $region62: #{tpu_custom_call.1} parent=55 // pred_check_branch
        %1474 = sbr.rel (%p1472) target = $region64
      $region63: #{tpu_custom_call.1} parent=55 // pred_region
        %v1475 = vld [vmem:[#allocation2] sm:$0xff]
        %v1476 = vld [vmem:[#allocation2 + $0x8] sm:$0xff]
        %v1477 = vld [vmem:[#allocation2 + $0x10] sm:$0xff]
        %v1478 = vld [vmem:[#allocation2 + $0x18] sm:$0xff]
        %v1479 = vsel %vm1466, %v1475, -inf
        %1480 = vmax.xlane.f32.xlu0 %v1479
        %v1481 = vpop.xlane.xlu0 %1480
        %v1482 = vsel %vm1466, %v1476, -inf
        %1483 = vmax.xlane.f32.xlu0 %v1482
        %v1484 = vpop.xlane.xlu0 %1483
        %v1485 = vsel %vm1466, %v1477, -inf
        %1486 = vmax.xlane.f32.xlu0 %v1485
        %v1487 = vpop.xlane.xlu0 %1486
        %v1488 = vsel %vm1466, %v1478, -inf
        %1489 = vmax.xlane.f32.xlu0 %v1488
        %v1490 = vpop.xlane.xlu0 %1489
        %vm1491 = vcmask 7168
        %1492 = vst.msk [vmem:[%s464] sm:$0xff] %vm1491, %v1481
        %1493 = vst.msk [vmem:[%s464 + $0x8] sm:$0xff] %vm1491, %v1484
        %1494 = vst.msk [vmem:[%s464 + $0x10] sm:$0xff] %vm1491, %v1487
        %1495 = vst.msk [vmem:[%s464 + $0x18] sm:$0xff] %vm1491, %v1490
      $region64: #{tpu_custom_call.1} parent=55 // pred_fallthru
        _
      %p1496 = scmp.lt.s32.totalorder %s24, 1
      %s1497 = scalar_select %p1496, %s24, 1
      %s1498 = smul.addr %s1497, 4
      %s1499 = smul.addr %s1498, 8
      %s1500 = scalar_lea.vmem %s9, %s1499
      // Predicated region
      $region65: #{tpu_custom_call.1} parent=55 // pred_check
        %p1501 = pneg %p274
      $region66: #{tpu_custom_call.1} parent=55 // pred_check_branch
        %1503 = sbr.rel (%p1501) target = $region68
      $region67: #{tpu_custom_call.1} parent=55 // pred_region
        _
      $region68: #{tpu_custom_call.1} parent=55 // pred_fallthru
        _
    $region56: #{tpu_custom_call.1} parent=5 // pred_fallthru
      _
    %p1504 = scmp.le.s32.totalorder 2, %s15
    // Predicated region
    $region69: #{tpu_custom_call.1} parent=5 // pred_check
      %p1505 = pneg %p1504
    $region70: #{tpu_custom_call.1} parent=5 // pred_check_branch
      %1507 = sbr.rel (%p1505) target = $region72
    $region71: #{tpu_custom_call.1} parent=5 // pred_region
      %s1508 = ssub.s32 %s15, 2
      // Predicated region
      $region73: #{tpu_custom_call.1} parent=71 // pred_check
        %p1509 = pneg %p280
      $region74: #{tpu_custom_call.1} parent=71 // pred_check_branch
        %1511 = sbr.rel (%p1509) target = $region76
      $region75: #{tpu_custom_call.1} parent=71 // pred_region
        %p1512 = scmp.lt.s32.totalorder %s26, 1
        %s1513 = scalar_select %p1512, %s26, 1
        %s1514 = smul.addr %s1513, 4
        %s1515 = smul.addr %s1514, 8
        %s1516 = scalar_lea.vmem %s9, %s1515
      $region76: #{tpu_custom_call.1} parent=71 // pred_fallthru
        _
    $region72: #{tpu_custom_call.1} parent=5 // pred_fallthru
      _
  $region6: #{tpu_custom_call.1} parent=0 // loop_footer
    %s19 = sadd.s32 1, %s15
  $region7: #{tpu_custom_call.1} parent=0 // loop_footer_branch
    %14 = sbr.rel target = $region3
  $region8: #{tpu_custom_call.1} parent=0 // loop_exit
    _

</llo_original>
